<compile_context>
chip_gen: v6e
topology: v6e:2x2x1
jax: 0.10.0
libtpu: 0.0.40
codegen_flags: <defaults>
</compile_context>

<pallas_src>
import jax
import jax.numpy as jnp
from jax.experimental import pallas as pl
from jax.experimental.pallas import tpu as pltpu


def _round_up(x, m):
    return ((x + m - 1) // m) * m


def _largest_tile(n, cap):
    """Largest multiple of 128 that divides n (n is a multiple of 128) and is <= cap."""
    start = (min(cap, n) // 128) * 128
    for cand in range(start, 0, -128):
        if n % cand == 0:
            return cand
    return 128


def _linear_kernel(x_ref, w_ref, b_ref, o_ref):
    # grid axes: (i: batch tile, j: label tile, k: contraction tile)
    k = pl.program_id(2)

    @pl.when(k == 0)
    def _():
        # Init the resident f32 output block with the bias (folded epilogue).
        o_ref[...] = jnp.broadcast_to(b_ref[...], o_ref.shape)

    # x tile: (tb, tk) bf16 ; W tile: (tk, tl) bf16, already in [K, N] layout.
    o_ref[...] += jnp.dot(
        x_ref[...], w_ref[...], preferred_element_type=jnp.float32
    )


class LinearClassifierPallas:
    """Pallas TPU equivalent of LinearClassifier.forward (y = x.view(B,-1) @ W^T + b).

    Weight prep (cast / transpose / pad) is hoisted out of the forward path and
    cached at construction time.
    """

    def __init__(self, weight, bias, *, tk_max=2048, tl_max=512):
        weight = jnp.asarray(weight)
        bias = jnp.asarray(bias)
        L, D = weight.shape
        assert bias.shape == (L,)
        self.D, self.L = D, L
        self.Dpad = _round_up(D, 128)
        self.Lpad = _round_up(L, 128)

        # One-time: transpose to (D, L), cast to bf16, zero-pad to 128 multiples.
        w_dl = weight.T.astype(jnp.bfloat16)
        if (self.Dpad, self.Lpad) != (D, L):
            w_dl = jnp.pad(w_dl, ((0, self.Dpad - D), (0, self.Lpad - L)))
        b = bias.astype(jnp.float32)
        if self.Lpad != L:
            b = jnp.pad(b, (0, self.Lpad - L))

        self.w_dl = jax.block_until_ready(w_dl)          # (Dpad, Lpad) bf16, cached
        self.b_row = jax.block_until_ready(b.reshape(1, self.Lpad))  # (1, Lpad) f32

        # Tiles: largest 128-multiples dividing the padded dims (no K over-padding).
        self.tk = _largest_tile(self.Dpad, tk_max)
        self.tl = _largest_tile(self.Lpad, tl_max)

    def __call__(self, x):
        B = x.shape[0]
        x_flat = x.reshape(B, -1)                        # same as torch .view(B, -1)
        assert x_flat.shape[1] == self.D, "feature dim mismatch"

        # Batch tile: >=16 rows (unmasked bf16 sublane access), up to 256 so W is
        # re-streamed as few times as possible (once for typical probe batches).
        tb = _round_up(min(B, 256), 16)
        Bpad = _round_up(B, tb)

        x_bf = x_flat.astype(jnp.bfloat16)
        if (Bpad, self.Dpad) != (B, self.D):
            x_bf = jnp.pad(x_bf, ((0, Bpad - B), (0, self.Dpad - self.D)))

        grid = (Bpad // tb, self.Lpad // self.tl, self.Dpad // self.tk)

        # Rough double-buffered VMEM working set; only raise the scoped limit if needed.
        est = (2 * (tb * self.tk + self.tk * self.tl) * 2   # bf16 x + W, 2 buffers each
               + 2 * tb * self.tl * 4                       # f32 resident output
               + 2 * self.tl * 4)                           # bias
        cp_kwargs = dict(dimension_semantics=("parallel", "parallel", "arbitrary"))
        if est > (12 << 20):
            cp_kwargs["vmem_limit_bytes"] = min(int(est * 2), 48 << 20)

        out = pl.pallas_call(
            _linear_kernel,
            out_shape=jax.ShapeDtypeStruct((Bpad, self.Lpad), jnp.float32),
            grid_spec=pltpu.PrefetchScalarGridSpec(
                num_scalar_prefetch=0,
                grid=grid,
                in_specs=[
                    pl.BlockSpec((tb, self.tk), lambda i, j, k: (i, k)),       # x  (B, K)
                    pl.BlockSpec((self.tk, self.tl), lambda i, j, k: (k, j)),  # W  (K, L)
                    pl.BlockSpec((1, self.tl), lambda i, j, k: (0, j)),        # bias
                ],
                out_specs=pl.BlockSpec((tb, self.tl), lambda i, j, k: (i, j)),  # resident acc
            ),
            compiler_params=pltpu.CompilerParams(**cp_kwargs),
        )(x_bf, self.w_dl, self.b_row)

        return out[:B, :self.L]


if __name__ == "__main__":
    key = jax.random.PRNGKey(0)
    k_x, k_w = jax.random.split(key)

    # Small shapes consistent with the module: features (B, C, H, W) -> dim = C*H*W
    B, C, H, W = 2, 4, 16, 16
    dim = C * H * W            # 1024
    num_labels = 1000

    x = jax.random.normal(k_x, (B, C, H, W), dtype=jnp.float32)

    # Deterministic init matching the module's __init__:
    #   weight ~ N(0, 0.01), bias = 0
    weight = 0.01 * jax.random.normal(k_w, (num_labels, dim), dtype=jnp.float32)
    bias = jnp.zeros((num_labels,), dtype=jnp.float32)

    clf = LinearClassifierPallas(weight, bias)    # one-time weight prep, cached
    out = clf(x)
    out = jax.block_until_ready(out)

    # Reference check in plain JAX (f32); tolerance covers the bf16 operand cast.
    ref = x.reshape(B, -1) @ weight.T + bias
    assert out.shape == (B, num_labels)
    assert out.dtype == jnp.float32
    assert jnp.allclose(out, ref, atol=1e-2, rtol=1e-2)

    print("KERNEL_OK")
</pallas_src>

<mosaic_0001>
module attributes {stable_mosaic.version = 11 : i64} {
  func.func @_linear_kernel(%arg0: i32, %arg1: i32, %arg2: i32, %arg3: memref<16x1024xbf16, #tpu.memory_space<vmem>>, %arg4: memref<1024x512xbf16, #tpu.memory_space<vmem>>, %arg5: memref<1x512xf32, #tpu.memory_space<vmem>>, %arg6: memref<16x512xf32, #tpu.memory_space<vmem>>) attributes {dimension_semantics = [#tpu.dimension_semantics<parallel>, #tpu.dimension_semantics<parallel>, #tpu.dimension_semantics<arbitrary>], iteration_bounds = array<i64: 1, 2, 1>, scalar_prefetch = 0 : i64, scratch_operands = 0 : i64, tpu.core_type = #tpu.core_type<tc>, window_params = [{transform_indices = @transform_0, window_bounds = array<i64: 16, 1024>}, {transform_indices = @transform_1, window_bounds = array<i64: 1024, 512>}, {transform_indices = @transform_2, window_bounds = array<i64: 1, 512>}, {transform_indices = @transform_3, window_bounds = array<i64: 16, 512>}]} {
    %c0_i32 = arith.constant 0 : i32
    %0 = arith.cmpi eq, %arg2, %c0_i32 : i32
    %1 = arith.extui %0 : i1 to i32
    %c0_i32_0 = arith.constant 0 : i32
    %2 = arith.cmpi ne, %1, %c0_i32_0 : i32
    scf.if %2 {
      %c0_8 = arith.constant 0 : index
      %c0_9 = arith.constant 0 : index
      %9 = vector.load %arg5[%c0_8, %c0_9] : memref<1x512xf32, #tpu.memory_space<vmem>>, vector<1x512xf32>
      %10 = vector.shape_cast %9 : vector<1x512xf32> to vector<1x512xf32>
      %11 = vector.broadcast %10 : vector<1x512xf32> to vector<16x512xf32>
      %c0_10 = arith.constant 0 : index
      %c0_11 = arith.constant 0 : index
      %12 = vector.load %arg6[%c0_10, %c0_11] : memref<16x512xf32, #tpu.memory_space<vmem>>, vector<16x512xf32>
      tpu.vector_store %arg6[%c0_10, %c0_11], %11 {strides = array<i32>} : memref<16x512xf32, #tpu.memory_space<vmem>>, vector<16x512xf32>,
    } else {
    }
    %c0 = arith.constant 0 : index
    %c0_1 = arith.constant 0 : index
    %3 = vector.load %arg6[%c0, %c0_1] : memref<16x512xf32, #tpu.memory_space<vmem>>, vector<16x512xf32>
    %c0_2 = arith.constant 0 : index
    %c0_3 = arith.constant 0 : index
    %4 = vector.load %arg3[%c0_2, %c0_3] : memref<16x1024xbf16, #tpu.memory_space<vmem>>, vector<16x1024xbf16>
    %c0_4 = arith.constant 0 : index
    %c0_5 = arith.constant 0 : index
    %5 = vector.load %arg4[%c0_4, %c0_5] : memref<1024x512xbf16, #tpu.memory_space<vmem>>, vector<1024x512xbf16>
    %cst = arith.constant dense<0.000000e+00> : vector<16x512xf32>
    %6 = tpu.matmul %4, %5, %cst {dimension_numbers = #tpu.dot_dimension_numbers<[1], [0], [0], [1], [0, 0, 1, 1], [], []>} : vector<16x1024xbf16>, vector<1024x512xbf16>, vector<16x512xf32> -> vector<16x512xf32>
    %7 = arith.addf %3, %6 : vector<16x512xf32>
    %c0_6 = arith.constant 0 : index
    %c0_7 = arith.constant 0 : index
    %8 = vector.load %arg6[%c0_6, %c0_7] : memref<16x512xf32, #tpu.memory_space<vmem>>, vector<16x512xf32>
    tpu.vector_store %arg6[%c0_6, %c0_7], %7 {strides = array<i32>} : memref<16x512xf32, #tpu.memory_space<vmem>>, vector<16x512xf32>,
    return
  }
  func.func @transform_0(%arg0: i32, %arg1: i32, %arg2: i32) -> (i32, i32) {
    %c0_i32 = arith.constant 0 : i32
    return %arg0, %arg2 : i32, i32
  }
  func.func @transform_1(%arg0: i32, %arg1: i32, %arg2: i32) -> (i32, i32) {
    %c0_i32 = arith.constant 0 : i32
    return %arg2, %arg1 : i32, i32
  }
  func.func @transform_2(%arg0: i32, %arg1: i32, %arg2: i32) -> (i32, i32) {
    %c0_i32 = arith.constant 0 : i32
    %c0_i32_0 = arith.constant 0 : i32
    return %c0_i32, %arg1 : i32, i32
  }
  func.func @transform_3(%arg0: i32, %arg1: i32, %arg2: i32) -> (i32, i32) {
    %c0_i32 = arith.constant 0 : i32
    return %arg0, %arg1 : i32, i32
  }
}

</mosaic_0001>

<llo_original>
// kernel: tpu_custom_call.1
$region0: #{tpu_custom_call.1}
  #allocation0 [shape = 'u32[]', space=smem, size = 0x4, offset = 0x4, fixed_abs, tag = 'smem constant byte address 0x4 - core index']
  #allocation1 [shape = 'u32[144,128]{1,0:T(1,128)}', space=vmem, size = 0x12000, scoped, tag = 'internal scratch']
  %s0 = inlined_call_operand.hbm [shape: bf16[16,1024], index: 0, kind: input, shape index: {}]
  %s1 = inlined_call_operand.hbm [shape: bf16[1024,1024], index: 1, kind: input, shape index: {}]
  %s2 = inlined_call_operand.hbm [shape: f32[1,1024], index: 2, kind: input, shape index: {}]
  %s3 = inlined_call_operand.hbm [shape: f32[16,1024], index: 3, kind: output, shape index: {}]
  %s4 = sld [smem:[#allocation0]]
  $region61: #{tpu_custom_call.1} parent=0
    _
  %s6 = ssub.s32 1, %s4
  %s7 = scalar_select 0, %s6, %s4
  $region1: #{tpu_custom_call.1} parent=0
    #allocation2 [shape = 'u8[32768]{0}', space=vmem, size = 0x8000, scoped, tag = 'input window, operand 0, single buffered']
    #allocation3 [shape = 's32[2]{0}', space=sflag, size = 0x8, scoped, tag = 'scoped memory for tpu_custom_call.1']
    #allocation4 [shape = 's32[2]{0}', space=sflag, size = 0x8, scoped, tag = 'scoped memory for tpu_custom_call.1']
    #allocation5 [shape = 'u8[2097152]{0}', space=vmem, size = 0x200000, scoped, tag = 'input window, operand 1']
    #allocation6 [shape = 's32[2]{0}', space=sflag, size = 0x8, scoped, tag = 'scoped memory for tpu_custom_call.1']
    #allocation7 [shape = 'u8[4096]{0}', space=vmem, size = 0x1000, scoped, tag = 'input window, operand 2']
    #allocation8 [shape = 'u8[65536]{0}', space=vmem, size = 0x10000, scoped, tag = 'output window, operand 0']
    %8 = vsyncpa [#allocation3], 0
    %9 = vsyncpa [#allocation6], 0
    %s10 = scalar_lea.sflag [#allocation6], 1
    %11 = vsyncpa %s10, 0
    %12 = vsyncpa [#allocation4], 0
    %s13 = scalar_lea.sflag [#allocation4], 1
    %14 = vsyncpa %s13, 0
    loop: start=0, step=1, limit=4
    $region2: #{tpu_custom_call.1} parent=1 // loop_pre_header
      _
    $region3: #{tpu_custom_call.1} parent=1 // loop_header
      %s16 = sphi 0, %s20
      %p17 = scmp.ge.s32.totalorder %s16, 4
      %s23 = sphi 0, %s42
      %s24 = sphi 0, %s38
      %s25 = sphi 0, %s34
      %s26 = sphi 0, %s23
      %s27 = sphi 0, %s24
      %s28 = sphi 0, %s25
      %s29 = sphi 0, %s26
      %s30 = sphi 0, %s27
      %s31 = sphi 0, %s28
      %s47 = sphi 0, %s49
      %s50 = sphi 0, %s47
      %s51 = sphi 0, %s50
      %s67 = sphi 0, %s51
      %s75 = sphi 0, %s77
      %s78 = sphi 0, %s75
      %s79 = sphi 0, %s78
      %s95 = sphi 0, %s79
      %s101 = sphi 0, %s103
      %s104 = sphi 0, %s101
      %s105 = sphi 0, %s104
      %s121 = sphi 0, %s105
      %s129 = sphi 0, %s131
      %s132 = sphi 0, %s129
      %s133 = sphi 0, %s132
      %s149 = sphi 0, %s133
    $region4: #{tpu_custom_call.1} parent=1 // loop_header_branch
      %19 = sbr.rel (%p17) target = $region8
    $region5: #{tpu_custom_call.1} parent=1 // loop_body
      %s21 = ssub.s32 %s16, 1
      %s22 = ssub.s32 %s16, 2
      %s32 = sadd.s32 1, %s25
      %p33 = scmp.ge.s32.totalorder %s32, 1
      %s34 = scalar_select %p33, 0, %s32
      %s35 = sadd.s32 1, %s24
      %s36 = scalar_select %p33, %s35, %s24
      %p37 = scmp.ge.s32.totalorder %s36, 2
      %s38 = scalar_select %p37, 0, %s36
      %s39 = sadd.s32 1, %s23
      %s40 = scalar_select %p37, %s39, %s23
      %p41 = scmp.ge.s32.totalorder %s40, 1
      %s42 = scalar_select %p41, 0, %s40
      %s43 = ssub.s32 %s23, %s42
      %s44 = ssub.s32 %s25, %s34
      %s45 = sor.u32 %s43, %s44
      %p46 = scmp.eq.s32.totalorder %s45, 0
      %s48 = sadd.s32 %s47, 1
      %s49 = scalar_select %p46, %s47, %s48
      %p52 = pneg %p46
      %p53 = scmp.eq.s32.totalorder %s16, 1
      %p54 = por %p52, %p53
      %p55 = scmp.ne.s32.totalorder %s47, %s50
      %p56 = scmp.eq.s32.totalorder %s16, 0
      %p57 = por %p55, %p56
      %p58 = scmp.ne.s32.totalorder %s47, %s50
      %p59 = scmp.eq.s32.totalorder %s21, 1
      %p60 = por %p58, %p59
      %p61 = scmp.ne.s32.totalorder %s50, %s51
      %p62 = scmp.eq.s32.totalorder %s21, 0
      %p63 = por %p61, %p62
      %p64 = scmp.ne.s32.totalorder %s50, %s51
      %p65 = scmp.eq.s32.totalorder %s22, 1
      %p66 = por %p64, %p65
      %p68 = scmp.ne.s32.totalorder %s51, %s67
      %p69 = scmp.eq.s32.totalorder %s22, 0
      %p70 = por %p68, %p69
      %s71 = ssub.s32 %s25, %s34
      %s72 = ssub.s32 %s24, %s38
      %s73 = sor.u32 %s71, %s72
      %p74 = scmp.eq.s32.totalorder %s73, 0
      %s76 = sadd.s32 %s75, 1
      %s77 = scalar_select %p74, %s75, %s76
      %p80 = pneg %p74
      %p81 = scmp.eq.s32.totalorder %s16, 1
      %p82 = por %p80, %p81
      %p83 = scmp.ne.s32.totalorder %s75, %s78
      %p84 = scmp.eq.s32.totalorder %s16, 0
      %p85 = por %p83, %p84
      %p86 = scmp.ne.s32.totalorder %s75, %s78
      %p87 = scmp.eq.s32.totalorder %s21, 1
      %p88 = por %p86, %p87
      %p89 = scmp.ne.s32.totalorder %s78, %s79
      %p90 = scmp.eq.s32.totalorder %s21, 0
      %p91 = por %p89, %p90
      %p92 = scmp.ne.s32.totalorder %s78, %s79
      %p93 = scmp.eq.s32.totalorder %s22, 1
      %p94 = por %p92, %p93
      %p96 = scmp.ne.s32.totalorder %s79, %s95
      %p97 = scmp.eq.s32.totalorder %s22, 0
      %p98 = por %p96, %p97
      %s99 = ssub.s32 %s24, %s38
      %p100 = scmp.eq.s32.totalorder %s99, 0
      %s102 = sadd.s32 %s101, 1
      %s103 = scalar_select %p100, %s101, %s102
      %p106 = pneg %p100
      %p107 = scmp.eq.s32.totalorder %s16, 1
      %p108 = por %p106, %p107
      %p109 = scmp.ne.s32.totalorder %s101, %s104
      %p110 = scmp.eq.s32.totalorder %s16, 0
      %p111 = por %p109, %p110
      %p112 = scmp.ne.s32.totalorder %s101, %s104
      %p113 = scmp.eq.s32.totalorder %s21, 1
      %p114 = por %p112, %p113
      %p115 = scmp.ne.s32.totalorder %s104, %s105
      %p116 = scmp.eq.s32.totalorder %s21, 0
      %p117 = por %p115, %p116
      %p118 = scmp.ne.s32.totalorder %s104, %s105
      %p119 = scmp.eq.s32.totalorder %s22, 1
      %p120 = por %p118, %p119
      %p122 = scmp.ne.s32.totalorder %s105, %s121
      %p123 = scmp.eq.s32.totalorder %s22, 0
      %p124 = por %p122, %p123
      %s125 = ssub.s32 %s23, %s42
      %s126 = ssub.s32 %s24, %s38
      %s127 = sor.u32 %s125, %s126
      %p128 = scmp.eq.s32.totalorder %s127, 0
      %s130 = sadd.s32 %s129, 1
      %s131 = scalar_select %p128, %s129, %s130
      %p134 = pneg %p128
      %p135 = scmp.eq.s32.totalorder %s16, 1
      %p136 = por %p134, %p135
      %p137 = scmp.ne.s32.totalorder %s129, %s132
      %p138 = scmp.eq.s32.totalorder %s16, 0
      %p139 = por %p137, %p138
      %p140 = scmp.ne.s32.totalorder %s129, %s132
      %p141 = scmp.eq.s32.totalorder %s21, 1
      %p142 = por %p140, %p141
      %p143 = scmp.ne.s32.totalorder %s132, %s133
      %p144 = scmp.eq.s32.totalorder %s21, 0
      %p145 = por %p143, %p144
      %p146 = scmp.ne.s32.totalorder %s132, %s133
      %p147 = scmp.eq.s32.totalorder %s22, 1
      %p148 = por %p146, %p147
      %p150 = scmp.ne.s32.totalorder %s133, %s149
      %p151 = scmp.eq.s32.totalorder %s22, 0
      %p152 = por %p150, %p151
      %p153 = scmp.le.s32.totalorder 1, %s16
      %p154 = scmp.lt.s32.totalorder %s16, 3
      %p155 = pnand %p153, %p154
      %p156 = pneg %p155
      // Predicated region
      $region9: #{tpu_custom_call.1} parent=5 // pred_check
        _
      $region10: #{tpu_custom_call.1} parent=5 // pred_check_branch
        %158 = sbr.rel (%p155) target = $region12
      $region11: #{tpu_custom_call.1} parent=5 // pred_region
        %s159 = ssub.s32 %s16, 1
        // Predicated region
        $region13: #{tpu_custom_call.1} parent=11 // pred_check
          %p160 = pneg %p63
        $region14: #{tpu_custom_call.1} parent=11 // pred_check_branch
          %162 = sbr.rel (%p160) target = $region16
        $region15: #{tpu_custom_call.1} parent=11 // pred_region
          %s163 = smul.u32 2, %s26
          %s164 = smul.u32 8, %s28
          %s166 = ssub.s32 1024, 1024
          %167 = vsyncadd [#allocation3], %s166
          %s168 = smul.addr %s163, 8
          %s169 = sadd.s32 %s164, %s168
          %s170 = smul.addr %s169, 64
          %s171 = scalar_lea.hbm %s0, %s170
          %s172 = sshll.u32 [#allocation2], 4
          %s173 = int_to_ptr.vmem [resolvable:$true] %s172
          %178 = dma.hbm_to_vmem [thread:$0]  %s171, 1024, %s173, [#allocation3], 512, 512, 32
        $region16: #{tpu_custom_call.1} parent=11 // pred_fallthru
          _
      $region12: #{tpu_custom_call.1} parent=5 // pred_fallthru
        _
      %p179 = scmp.lt.s32.totalorder %s16, 2
      // Predicated region
      $region17: #{tpu_custom_call.1} parent=5 // pred_check
        %p180 = pneg %p179
      $region18: #{tpu_custom_call.1} parent=5 // pred_check_branch
        %182 = sbr.rel (%p180) target = $region20
      $region19: #{tpu_custom_call.1} parent=5 // pred_region
        // Predicated region
        $region21: #{tpu_custom_call.1} parent=19 // pred_check
          %p183 = pneg %p85
        $region22: #{tpu_custom_call.1} parent=19 // pred_check_branch
          %185 = sbr.rel (%p183) target = $region24
        $region23: #{tpu_custom_call.1} parent=19 // pred_region
          %s186 = sand.u32 %s16, 1
          %s187 = scalar_lea.sflag [#allocation6], %s186
          %s188 = sand.u32 %s75, 1
          %s189 = smul.addr %s188, 2048
          %s190 = scalar_lea.vmem [#allocation5], %s189
          %s191 = smul.u32 128, %s25
          %s192 = smul.u32 4, %s24
          %s194 = ssub.s32 32768, 32768
          %195 = vsyncadd %s187, %s194
          %s196 = smul.addr %s191, 8
          %s197 = sadd.s32 %s192, %s196
          %s198 = smul.addr %s197, 64
          %s199 = scalar_lea.hbm %s1, %s198
          %s200 = sshll.u32 %s190, 4
          %s201 = int_to_ptr.vmem [resolvable:$true] %s200
          %206 = dma.hbm_to_vmem [thread:$0]  %s199, 32768, %s201, %s187, 512, 256, 16
        $region24: #{tpu_custom_call.1} parent=19 // pred_fallthru
          _
        // Predicated region
        $region25: #{tpu_custom_call.1} parent=19 // pred_check
          %p207 = pneg %p111
        $region26: #{tpu_custom_call.1} parent=19 // pred_check_branch
          %209 = sbr.rel (%p207) target = $region28
        $region27: #{tpu_custom_call.1} parent=19 // pred_region
          %s210 = sand.u32 %s16, 1
          %s211 = scalar_lea.sflag [#allocation6], %s210
          %s212 = sand.u32 %s101, 1
          %s213 = smul.addr %s212, 4
          %s214 = scalar_lea.vmem [#allocation7], %s213
          %s215 = smul.u32 4, %s24
          %s217 = ssub.s32 64, 64
          %218 = vsyncadd %s211, %s217
          %s219 = smul.addr %s215, 16
          %s220 = scalar_lea.hbm %s2, %s219
          %s222 = sshll.u32 %s214, 4
          %s223 = int_to_ptr.vmem [resolvable:$true] %s222
          %225 = dma.hbm_to_vmem [thread:$0]  %s220, 64, %s223, %s211
        $region28: #{tpu_custom_call.1} parent=19 // pred_fallthru
          _
      $region20: #{tpu_custom_call.1} parent=5 // pred_fallthru
        _
      %p226 = scmp.le.s32.totalorder 1, %s16
      %p227 = scmp.lt.s32.totalorder %s16, 3
      %p228 = pnand %p226, %p227
      %p229 = pneg %p228
      // Predicated region
      $region29: #{tpu_custom_call.1} parent=5 // pred_check
        _
      $region30: #{tpu_custom_call.1} parent=5 // pred_check_branch
        %231 = sbr.rel (%p228) target = $region32
      $region31: #{tpu_custom_call.1} parent=5 // pred_region
        %s232 = ssub.s32 %s16, 1
        // Predicated region
        $region33: #{tpu_custom_call.1} parent=31 // pred_check
          %p233 = pneg %p63
        $region34: #{tpu_custom_call.1} parent=31 // pred_check_branch
          %235 = sbr.rel (%p233) target = $region36
        $region35: #{tpu_custom_call.1} parent=31 // pred_region
          %236 = dma.done [#allocation3], 1024
        $region36: #{tpu_custom_call.1} parent=31 // pred_fallthru
          _
        %s237 = sand.u32 %s21, 1
        %s238 = scalar_lea.sflag [#allocation6], %s237
        %s239 = sand.u32 %s78, 1
        %s240 = smul.addr %s239, 2048
        %s241 = scalar_lea.vmem [#allocation5], %s240
        // Predicated region
        $region37: #{tpu_custom_call.1} parent=31 // pred_check
          %p242 = pneg %p91
        $region38: #{tpu_custom_call.1} parent=31 // pred_check_branch
          %244 = sbr.rel (%p242) target = $region40
        $region39: #{tpu_custom_call.1} parent=31 // pred_region
          %245 = dma.done %s238, 32768
        $region40: #{tpu_custom_call.1} parent=31 // pred_fallthru
          _
        %s246 = sand.u32 %s21, 1
        %s247 = scalar_lea.sflag [#allocation6], %s246
        %s248 = sand.u32 %s104, 1
        %s249 = smul.addr %s248, 4
        %s250 = scalar_lea.vmem [#allocation7], %s249
        // Predicated region
        $region41: #{tpu_custom_call.1} parent=31 // pred_check
          %p251 = pneg %p117
        $region42: #{tpu_custom_call.1} parent=31 // pred_check_branch
          %253 = sbr.rel (%p251) target = $region44
        $region43: #{tpu_custom_call.1} parent=31 // pred_region
          %254 = dma.done %s247, 64
        $region44: #{tpu_custom_call.1} parent=31 // pred_fallthru
          _
        %p255 = pneg %p63
        %p256 = pneg %p60
        %s257 = sand.u32 %s21, 1
        %s258 = scalar_lea.sflag [#allocation6], %s257
        %s259 = sand.u32 %s78, 1
        %s260 = smul.addr %s259, 2048
        %s261 = scalar_lea.vmem [#allocation5], %s260
        %p262 = pneg %p91
        %p263 = pneg %p88
        %s264 = sand.u32 %s21, 1
        %s265 = scalar_lea.sflag [#allocation6], %s264
        %s266 = sand.u32 %s104, 1
        %s267 = smul.addr %s266, 4
        %s268 = scalar_lea.vmem [#allocation7], %s267
        %p269 = pneg %p117
        %p270 = pneg %p114
        %p271 = pneg %p145
        %p272 = pneg %p142
        %s273 = sand.u32 %s132, 1
        %s274 = scalar_lea.sflag [#allocation4], %s273
        %s275 = sand.u32 %s132, 1
        %s276 = smul.addr %s275, 64
        %s277 = scalar_lea.vmem [#allocation8], %s276
        %s278 = smul.u32 2, %s26
        %s279 = smul.u32 8, %s28
        %s280 = smul.u32 128, %s28
        %s281 = smul.u32 4, %s27
        %s282 = smul.u32 4, %s27
        %s283 = smul.u32 2, %s26
        %s284 = smul.u32 4, %s27
        %p285 = scmp.eq.s32.totalorder %s28, 0
        // Predicated region
        $region45: #{tpu_custom_call.1} parent=31 // pred_check
          %p286 = pneg %p285
        $region46: #{tpu_custom_call.1} parent=31 // pred_check_branch
          %288 = sbr.rel (%p286) target = $region48
        $region47: #{tpu_custom_call.1} parent=31 // pred_region
          %v289 = vld [vmem:[%s250] sm:$0xf]
          %v291 = vlaneseq
          %v292 = vshrl.u32 %v291, 7
          %v293 = vsub.s32 0, %v292
          %v294 = vrot.slane %v289, %v293
          %v295 = vlaneseq
          %v296 = vshrl.u32 %v295, 7
          %v297 = vsub.s32 1, %v296
          %v298 = vrot.slane %v289, %v297
          %v299 = vlaneseq
          %v300 = vshrl.u32 %v299, 7
          %v301 = vsub.s32 2, %v300
          %v302 = vrot.slane %v289, %v301
          %v303 = vlaneseq
          %v304 = vshrl.u32 %v303, 7
          %v305 = vsub.s32 3, %v304
          %v306 = vrot.slane %v289, %v305
          %311 = vst [vmem:[%s277] sm:$0xff] %v294
          %312 = vst [vmem:[%s277 + $0x8] sm:$0xff] %v298
          %313 = vst [vmem:[%s277 + $0x10] sm:$0xff] %v302
          %314 = vst [vmem:[%s277 + $0x18] sm:$0xff] %v306
          %315 = vst [vmem:[%s277 + $0x20] sm:$0xff] %v294
          %316 = vst [vmem:[%s277 + $0x28] sm:$0xff] %v298
          %317 = vst [vmem:[%s277 + $0x30] sm:$0xff] %v302
          %318 = vst [vmem:[%s277 + $0x38] sm:$0xff] %v306
        $region48: #{tpu_custom_call.1} parent=31 // pred_fallthru
          _
        %v319 = vld [vmem:[%s277] sm:$0xff]
        %v320 = vld [vmem:[%s277 + $0x8] sm:$0xff]
        %v321 = vld [vmem:[%s277 + $0x10] sm:$0xff]
        %v322 = vld [vmem:[%s277 + $0x18] sm:$0xff]
        %v323 = vld [vmem:[%s277 + $0x20] sm:$0xff]
        %v324 = vld [vmem:[%s277 + $0x28] sm:$0xff]
        %v325 = vld [vmem:[%s277 + $0x30] sm:$0xff]
        %v326 = vld [vmem:[%s277 + $0x38] sm:$0xff]
        %v327 = vld [vmem:[#allocation2] sm:$0xff]
        %v328 = vld [vmem:[#allocation2 + $0x8] sm:$0xff]
        %v329 = vld [vmem:[#allocation2 + $0x10] sm:$0xff]
        %v330 = vld [vmem:[#allocation2 + $0x18] sm:$0xff]
        %v331 = vld [vmem:[#allocation2 + $0x20] sm:$0xff]
        %v332 = vld [vmem:[#allocation2 + $0x28] sm:$0xff]
        %v333 = vld [vmem:[#allocation2 + $0x30] sm:$0xff]
        %v334 = vld [vmem:[#allocation2 + $0x38] sm:$0xff]
        %v335 = vld [vmem:[%s241] sm:$0xff]
        %v336 = vld [vmem:[%s241 + $0x8] sm:$0xff]
        %v337 = vld [vmem:[%s241 + $0x10] sm:$0xff]
        %v338 = vld [vmem:[%s241 + $0x18] sm:$0xff]
        %v339 = vld [vmem:[%s241 + $0x20] sm:$0xff]
        %v340 = vld [vmem:[%s241 + $0x28] sm:$0xff]
        %v341 = vld [vmem:[%s241 + $0x30] sm:$0xff]
        %v342 = vld [vmem:[%s241 + $0x38] sm:$0xff]
        %v343 = vld [vmem:[%s241 + $0x40] sm:$0xff]
        %v344 = vld [vmem:[%s241 + $0x48] sm:$0xff]
        %v345 = vld [vmem:[%s241 + $0x50] sm:$0xff]
        %v346 = vld [vmem:[%s241 + $0x58] sm:$0xff]
        %v347 = vld [vmem:[%s241 + $0x60] sm:$0xff]
        %v348 = vld [vmem:[%s241 + $0x68] sm:$0xff]
        %v349 = vld [vmem:[%s241 + $0x70] sm:$0xff]
        %v350 = vld [vmem:[%s241 + $0x78] sm:$0xff]
        %v351 = vld [vmem:[%s241 + $0x80] sm:$0xff]
        %v352 = vld [vmem:[%s241 + $0x88] sm:$0xff]
        %v353 = vld [vmem:[%s241 + $0x90] sm:$0xff]
        %v354 = vld [vmem:[%s241 + $0x98] sm:$0xff]
        %v355 = vld [vmem:[%s241 + $0xa0] sm:$0xff]
        %v356 = vld [vmem:[%s241 + $0xa8] sm:$0xff]
        %v357 = vld [vmem:[%s241 + $0xb0] sm:$0xff]
        %v358 = vld [vmem:[%s241 + $0xb8] sm:$0xff]
        %v359 = vld [vmem:[%s241 + $0xc0] sm:$0xff]
        %v360 = vld [vmem:[%s241 + $0xc8] sm:$0xff]
        %v361 = vld [vmem:[%s241 + $0xd0] sm:$0xff]
        %v362 = vld [vmem:[%s241 + $0xd8] sm:$0xff]
        %v363 = vld [vmem:[%s241 + $0xe0] sm:$0xff]
        %v364 = vld [vmem:[%s241 + $0xe8] sm:$0xff]
        %v365 = vld [vmem:[%s241 + $0xf0] sm:$0xff]
        %v366 = vld [vmem:[%s241 + $0xf8] sm:$0xff]
        %v367 = vld [vmem:[%s241 + $0x100] sm:$0xff]
        %v368 = vld [vmem:[%s241 + $0x108] sm:$0xff]
        %v369 = vld [vmem:[%s241 + $0x110] sm:$0xff]
        %v370 = vld [vmem:[%s241 + $0x118] sm:$0xff]
        %v371 = vld [vmem:[%s241 + $0x120] sm:$0xff]
        %v372 = vld [vmem:[%s241 + $0x128] sm:$0xff]
        %v373 = vld [vmem:[%s241 + $0x130] sm:$0xff]
        %v374 = vld [vmem:[%s241 + $0x138] sm:$0xff]
        %v375 = vld [vmem:[%s241 + $0x140] sm:$0xff]
        %v376 = vld [vmem:[%s241 + $0x148] sm:$0xff]
        %v377 = vld [vmem:[%s241 + $0x150] sm:$0xff]
        %v378 = vld [vmem:[%s241 + $0x158] sm:$0xff]
        %v379 = vld [vmem:[%s241 + $0x160] sm:$0xff]
        %v380 = vld [vmem:[%s241 + $0x168] sm:$0xff]
        %v381 = vld [vmem:[%s241 + $0x170] sm:$0xff]
        %v382 = vld [vmem:[%s241 + $0x178] sm:$0xff]
        %v383 = vld [vmem:[%s241 + $0x180] sm:$0xff]
        %v384 = vld [vmem:[%s241 + $0x188] sm:$0xff]
        %v385 = vld [vmem:[%s241 + $0x190] sm:$0xff]
        %v386 = vld [vmem:[%s241 + $0x198] sm:$0xff]
        %v387 = vld [vmem:[%s241 + $0x1a0] sm:$0xff]
        %v388 = vld [vmem:[%s241 + $0x1a8] sm:$0xff]
        %v389 = vld [vmem:[%s241 + $0x1b0] sm:$0xff]
        %v390 = vld [vmem:[%s241 + $0x1b8] sm:$0xff]
        %v391 = vld [vmem:[%s241 + $0x1c0] sm:$0xff]
        %v392 = vld [vmem:[%s241 + $0x1c8] sm:$0xff]
        %v393 = vld [vmem:[%s241 + $0x1d0] sm:$0xff]
        %v394 = vld [vmem:[%s241 + $0x1d8] sm:$0xff]
        %v395 = vld [vmem:[%s241 + $0x1e0] sm:$0xff]
        %v396 = vld [vmem:[%s241 + $0x1e8] sm:$0xff]
        %v397 = vld [vmem:[%s241 + $0x1f0] sm:$0xff]
        %v398 = vld [vmem:[%s241 + $0x1f8] sm:$0xff]
        %v399 = vld [vmem:[%s241 + $0x200] sm:$0xff]
        %v400 = vld [vmem:[%s241 + $0x208] sm:$0xff]
        %v401 = vld [vmem:[%s241 + $0x210] sm:$0xff]
        %v402 = vld [vmem:[%s241 + $0x218] sm:$0xff]
        %v403 = vld [vmem:[%s241 + $0x220] sm:$0xff]
        %v404 = vld [vmem:[%s241 + $0x228] sm:$0xff]
        %v405 = vld [vmem:[%s241 + $0x230] sm:$0xff]
        %v406 = vld [vmem:[%s241 + $0x238] sm:$0xff]
        %v407 = vld [vmem:[%s241 + $0x240] sm:$0xff]
        %v408 = vld [vmem:[%s241 + $0x248] sm:$0xff]
        %v409 = vld [vmem:[%s241 + $0x250] sm:$0xff]
        %v410 = vld [vmem:[%s241 + $0x258] sm:$0xff]
        %v411 = vld [vmem:[%s241 + $0x260] sm:$0xff]
        %v412 = vld [vmem:[%s241 + $0x268] sm:$0xff]
        %v413 = vld [vmem:[%s241 + $0x270] sm:$0xff]
        %v414 = vld [vmem:[%s241 + $0x278] sm:$0xff]
        %v415 = vld [vmem:[%s241 + $0x280] sm:$0xff]
        %v416 = vld [vmem:[%s241 + $0x288] sm:$0xff]
        %v417 = vld [vmem:[%s241 + $0x290] sm:$0xff]
        %v418 = vld [vmem:[%s241 + $0x298] sm:$0xff]
        %v419 = vld [vmem:[%s241 + $0x2a0] sm:$0xff]
        %v420 = vld [vmem:[%s241 + $0x2a8] sm:$0xff]
        %v421 = vld [vmem:[%s241 + $0x2b0] sm:$0xff]
        %v422 = vld [vmem:[%s241 + $0x2b8] sm:$0xff]
        %v423 = vld [vmem:[%s241 + $0x2c0] sm:$0xff]
        %v424 = vld [vmem:[%s241 + $0x2c8] sm:$0xff]
        %v425 = vld [vmem:[%s241 + $0x2d0] sm:$0xff]
        %v426 = vld [vmem:[%s241 + $0x2d8] sm:$0xff]
        %v427 = vld [vmem:[%s241 + $0x2e0] sm:$0xff]
        %v428 = vld [vmem:[%s241 + $0x2e8] sm:$0xff]
        %v429 = vld [vmem:[%s241 + $0x2f0] sm:$0xff]
        %v430 = vld [vmem:[%s241 + $0x2f8] sm:$0xff]
        %v431 = vld [vmem:[%s241 + $0x300] sm:$0xff]
        %v432 = vld [vmem:[%s241 + $0x308] sm:$0xff]
        %v433 = vld [vmem:[%s241 + $0x310] sm:$0xff]
        %v434 = vld [vmem:[%s241 + $0x318] sm:$0xff]
        %v435 = vld [vmem:[%s241 + $0x320] sm:$0xff]
        %v436 = vld [vmem:[%s241 + $0x328] sm:$0xff]
        %v437 = vld [vmem:[%s241 + $0x330] sm:$0xff]
        %v438 = vld [vmem:[%s241 + $0x338] sm:$0xff]
        %v439 = vld [vmem:[%s241 + $0x340] sm:$0xff]
        %v440 = vld [vmem:[%s241 + $0x348] sm:$0xff]
        %v441 = vld [vmem:[%s241 + $0x350] sm:$0xff]
        %v442 = vld [vmem:[%s241 + $0x358] sm:$0xff]
        %v443 = vld [vmem:[%s241 + $0x360] sm:$0xff]
        %v444 = vld [vmem:[%s241 + $0x368] sm:$0xff]
        %v445 = vld [vmem:[%s241 + $0x370] sm:$0xff]
        %v446 = vld [vmem:[%s241 + $0x378] sm:$0xff]
        %v447 = vld [vmem:[%s241 + $0x380] sm:$0xff]
        %v448 = vld [vmem:[%s241 + $0x388] sm:$0xff]
        %v449 = vld [vmem:[%s241 + $0x390] sm:$0xff]
        %v450 = vld [vmem:[%s241 + $0x398] sm:$0xff]
        %v451 = vld [vmem:[%s241 + $0x3a0] sm:$0xff]
        %v452 = vld [vmem:[%s241 + $0x3a8] sm:$0xff]
        %v453 = vld [vmem:[%s241 + $0x3b0] sm:$0xff]
        %v454 = vld [vmem:[%s241 + $0x3b8] sm:$0xff]
        %v455 = vld [vmem:[%s241 + $0x3c0] sm:$0xff]
        %v456 = vld [vmem:[%s241 + $0x3c8] sm:$0xff]
        %v457 = vld [vmem:[%s241 + $0x3d0] sm:$0xff]
        %v458 = vld [vmem:[%s241 + $0x3d8] sm:$0xff]
        %v459 = vld [vmem:[%s241 + $0x3e0] sm:$0xff]
        %v460 = vld [vmem:[%s241 + $0x3e8] sm:$0xff]
        %v461 = vld [vmem:[%s241 + $0x3f0] sm:$0xff]
        %v462 = vld [vmem:[%s241 + $0x3f8] sm:$0xff]
        %v463 = vld [vmem:[%s241 + $0x400] sm:$0xff]
        %v464 = vld [vmem:[%s241 + $0x408] sm:$0xff]
        %v465 = vld [vmem:[%s241 + $0x410] sm:$0xff]
        %v466 = vld [vmem:[%s241 + $0x418] sm:$0xff]
        %v467 = vld [vmem:[%s241 + $0x420] sm:$0xff]
        %v468 = vld [vmem:[%s241 + $0x428] sm:$0xff]
        %v469 = vld [vmem:[%s241 + $0x430] sm:$0xff]
        %v470 = vld [vmem:[%s241 + $0x438] sm:$0xff]
        %v471 = vld [vmem:[%s241 + $0x440] sm:$0xff]
        %v472 = vld [vmem:[%s241 + $0x448] sm:$0xff]
        %v473 = vld [vmem:[%s241 + $0x450] sm:$0xff]
        %v474 = vld [vmem:[%s241 + $0x458] sm:$0xff]
        %v475 = vld [vmem:[%s241 + $0x460] sm:$0xff]
        %v476 = vld [vmem:[%s241 + $0x468] sm:$0xff]
        %v477 = vld [vmem:[%s241 + $0x470] sm:$0xff]
        %v478 = vld [vmem:[%s241 + $0x478] sm:$0xff]
        %v479 = vld [vmem:[%s241 + $0x480] sm:$0xff]
        %v480 = vld [vmem:[%s241 + $0x488] sm:$0xff]
        %v481 = vld [vmem:[%s241 + $0x490] sm:$0xff]
        %v482 = vld [vmem:[%s241 + $0x498] sm:$0xff]
        %v483 = vld [vmem:[%s241 + $0x4a0] sm:$0xff]
        %v484 = vld [vmem:[%s241 + $0x4a8] sm:$0xff]
        %v485 = vld [vmem:[%s241 + $0x4b0] sm:$0xff]
        %v486 = vld [vmem:[%s241 + $0x4b8] sm:$0xff]
        %v487 = vld [vmem:[%s241 + $0x4c0] sm:$0xff]
        %v488 = vld [vmem:[%s241 + $0x4c8] sm:$0xff]
        %v489 = vld [vmem:[%s241 + $0x4d0] sm:$0xff]
        %v490 = vld [vmem:[%s241 + $0x4d8] sm:$0xff]
        %v491 = vld [vmem:[%s241 + $0x4e0] sm:$0xff]
        %v492 = vld [vmem:[%s241 + $0x4e8] sm:$0xff]
        %v493 = vld [vmem:[%s241 + $0x4f0] sm:$0xff]
        %v494 = vld [vmem:[%s241 + $0x4f8] sm:$0xff]
        %v495 = vld [vmem:[%s241 + $0x500] sm:$0xff]
        %v496 = vld [vmem:[%s241 + $0x508] sm:$0xff]
        %v497 = vld [vmem:[%s241 + $0x510] sm:$0xff]
        %v498 = vld [vmem:[%s241 + $0x518] sm:$0xff]
        %v499 = vld [vmem:[%s241 + $0x520] sm:$0xff]
        %v500 = vld [vmem:[%s241 + $0x528] sm:$0xff]
        %v501 = vld [vmem:[%s241 + $0x530] sm:$0xff]
        %v502 = vld [vmem:[%s241 + $0x538] sm:$0xff]
        %v503 = vld [vmem:[%s241 + $0x540] sm:$0xff]
        %v504 = vld [vmem:[%s241 + $0x548] sm:$0xff]
        %v505 = vld [vmem:[%s241 + $0x550] sm:$0xff]
        %v506 = vld [vmem:[%s241 + $0x558] sm:$0xff]
        %v507 = vld [vmem:[%s241 + $0x560] sm:$0xff]
        %v508 = vld [vmem:[%s241 + $0x568] sm:$0xff]
        %v509 = vld [vmem:[%s241 + $0x570] sm:$0xff]
        %v510 = vld [vmem:[%s241 + $0x578] sm:$0xff]
        %v511 = vld [vmem:[%s241 + $0x580] sm:$0xff]
        %v512 = vld [vmem:[%s241 + $0x588] sm:$0xff]
        %v513 = vld [vmem:[%s241 + $0x590] sm:$0xff]
        %v514 = vld [vmem:[%s241 + $0x598] sm:$0xff]
        %v515 = vld [vmem:[%s241 + $0x5a0] sm:$0xff]
        %v516 = vld [vmem:[%s241 + $0x5a8] sm:$0xff]
        %v517 = vld [vmem:[%s241 + $0x5b0] sm:$0xff]
        %v518 = vld [vmem:[%s241 + $0x5b8] sm:$0xff]
        %v519 = vld [vmem:[%s241 + $0x5c0] sm:$0xff]
        %v520 = vld [vmem:[%s241 + $0x5c8] sm:$0xff]
        %v521 = vld [vmem:[%s241 + $0x5d0] sm:$0xff]
        %v522 = vld [vmem:[%s241 + $0x5d8] sm:$0xff]
        %v523 = vld [vmem:[%s241 + $0x5e0] sm:$0xff]
        %v524 = vld [vmem:[%s241 + $0x5e8] sm:$0xff]
        %v525 = vld [vmem:[%s241 + $0x5f0] sm:$0xff]
        %v526 = vld [vmem:[%s241 + $0x5f8] sm:$0xff]
        %v527 = vld [vmem:[%s241 + $0x600] sm:$0xff]
        %v528 = vld [vmem:[%s241 + $0x608] sm:$0xff]
        %v529 = vld [vmem:[%s241 + $0x610] sm:$0xff]
        %v530 = vld [vmem:[%s241 + $0x618] sm:$0xff]
        %v531 = vld [vmem:[%s241 + $0x620] sm:$0xff]
        %v532 = vld [vmem:[%s241 + $0x628] sm:$0xff]
        %v533 = vld [vmem:[%s241 + $0x630] sm:$0xff]
        %v534 = vld [vmem:[%s241 + $0x638] sm:$0xff]
        %v535 = vld [vmem:[%s241 + $0x640] sm:$0xff]
        %v536 = vld [vmem:[%s241 + $0x648] sm:$0xff]
        %v537 = vld [vmem:[%s241 + $0x650] sm:$0xff]
        %v538 = vld [vmem:[%s241 + $0x658] sm:$0xff]
        %v539 = vld [vmem:[%s241 + $0x660] sm:$0xff]
        %v540 = vld [vmem:[%s241 + $0x668] sm:$0xff]
        %v541 = vld [vmem:[%s241 + $0x670] sm:$0xff]
        %v542 = vld [vmem:[%s241 + $0x678] sm:$0xff]
        %v543 = vld [vmem:[%s241 + $0x680] sm:$0xff]
        %v544 = vld [vmem:[%s241 + $0x688] sm:$0xff]
        %v545 = vld [vmem:[%s241 + $0x690] sm:$0xff]
        %v546 = vld [vmem:[%s241 + $0x698] sm:$0xff]
        %v547 = vld [vmem:[%s241 + $0x6a0] sm:$0xff]
        %v548 = vld [vmem:[%s241 + $0x6a8] sm:$0xff]
        %v549 = vld [vmem:[%s241 + $0x6b0] sm:$0xff]
        %v550 = vld [vmem:[%s241 + $0x6b8] sm:$0xff]
        %v551 = vld [vmem:[%s241 + $0x6c0] sm:$0xff]
        %v552 = vld [vmem:[%s241 + $0x6c8] sm:$0xff]
        %v553 = vld [vmem:[%s241 + $0x6d0] sm:$0xff]
        %v554 = vld [vmem:[%s241 + $0x6d8] sm:$0xff]
        %v555 = vld [vmem:[%s241 + $0x6e0] sm:$0xff]
        %v556 = vld [vmem:[%s241 + $0x6e8] sm:$0xff]
        %v557 = vld [vmem:[%s241 + $0x6f0] sm:$0xff]
        %v558 = vld [vmem:[%s241 + $0x6f8] sm:$0xff]
        %v559 = vld [vmem:[%s241 + $0x700] sm:$0xff]
        %v560 = vld [vmem:[%s241 + $0x708] sm:$0xff]
        %v561 = vld [vmem:[%s241 + $0x710] sm:$0xff]
        %v562 = vld [vmem:[%s241 + $0x718] sm:$0xff]
        %v563 = vld [vmem:[%s241 + $0x720] sm:$0xff]
        %v564 = vld [vmem:[%s241 + $0x728] sm:$0xff]
        %v565 = vld [vmem:[%s241 + $0x730] sm:$0xff]
        %v566 = vld [vmem:[%s241 + $0x738] sm:$0xff]
        %v567 = vld [vmem:[%s241 + $0x740] sm:$0xff]
        %v568 = vld [vmem:[%s241 + $0x748] sm:$0xff]
        %v569 = vld [vmem:[%s241 + $0x750] sm:$0xff]
        %v570 = vld [vmem:[%s241 + $0x758] sm:$0xff]
        %v571 = vld [vmem:[%s241 + $0x760] sm:$0xff]
        %v572 = vld [vmem:[%s241 + $0x768] sm:$0xff]
        %v573 = vld [vmem:[%s241 + $0x770] sm:$0xff]
        %v574 = vld [vmem:[%s241 + $0x778] sm:$0xff]
        %v575 = vld [vmem:[%s241 + $0x780] sm:$0xff]
        %v576 = vld [vmem:[%s241 + $0x788] sm:$0xff]
        %v577 = vld [vmem:[%s241 + $0x790] sm:$0xff]
        %v578 = vld [vmem:[%s241 + $0x798] sm:$0xff]
        %v579 = vld [vmem:[%s241 + $0x7a0] sm:$0xff]
        %v580 = vld [vmem:[%s241 + $0x7a8] sm:$0xff]
        %v581 = vld [vmem:[%s241 + $0x7b0] sm:$0xff]
        %v582 = vld [vmem:[%s241 + $0x7b8] sm:$0xff]
        %v583 = vld [vmem:[%s241 + $0x7c0] sm:$0xff]
        %v584 = vld [vmem:[%s241 + $0x7c8] sm:$0xff]
        %v585 = vld [vmem:[%s241 + $0x7d0] sm:$0xff]
        %v586 = vld [vmem:[%s241 + $0x7d8] sm:$0xff]
        %v587 = vld [vmem:[%s241 + $0x7e0] sm:$0xff]
        %v588 = vld [vmem:[%s241 + $0x7e8] sm:$0xff]
        %v589 = vld [vmem:[%s241 + $0x7f0] sm:$0xff]
        %v590 = vld [vmem:[%s241 + $0x7f8] sm:$0xff]
        %v599 = vunpack.c.l.b16 %v327
        %v600 = vunpack.c.h.b16 %v327
        %v601 = vunpack.c.l.b16 %v328
        %v602 = vunpack.c.h.b16 %v328
        %v603 = vunpack.c.l.b16 %v329
        %v604 = vunpack.c.h.b16 %v329
        %v605 = vunpack.c.l.b16 %v330
        %v606 = vunpack.c.h.b16 %v330
        %v607 = vunpack.c.l.b16 %v331
        %v608 = vunpack.c.h.b16 %v331
        %v609 = vunpack.c.l.b16 %v332
        %v610 = vunpack.c.h.b16 %v332
        %v611 = vunpack.c.l.b16 %v333
        %v612 = vunpack.c.h.b16 %v333
        %v613 = vunpack.c.l.b16 %v334
        %v614 = vunpack.c.h.b16 %v334
        %v615 = vpack.c.b16 %v607, %v599
        %v616 = vpack.c.b16 %v608, %v600
        %v617 = vpack.c.b16 %v609, %v601
        %v618 = vpack.c.b16 %v610, %v602
        %v619 = vpack.c.b16 %v611, %v603
        %v620 = vpack.c.b16 %v612, %v604
        %v621 = vpack.c.b16 %v613, %v605
        %v622 = vpack.c.b16 %v614, %v606
        %v887 = vunpack.c.l.b16 %v335
        %v888 = vunpack.c.h.b16 %v335
        %v889 = vunpack.c.l.b16 %v336
        %v890 = vunpack.c.h.b16 %v336
        %v891 = vunpack.c.l.b16 %v337
        %v892 = vunpack.c.h.b16 %v337
        %v893 = vunpack.c.l.b16 %v338
        %v894 = vunpack.c.h.b16 %v338
        %v895 = vunpack.c.l.b16 %v339
        %v896 = vunpack.c.h.b16 %v339
        %v897 = vunpack.c.l.b16 %v340
        %v898 = vunpack.c.h.b16 %v340
        %v899 = vunpack.c.l.b16 %v341
        %v900 = vunpack.c.h.b16 %v341
        %v901 = vunpack.c.l.b16 %v342
        %v902 = vunpack.c.h.b16 %v342
        %v903 = vunpack.c.l.b16 %v343
        %v904 = vunpack.c.h.b16 %v343
        %v905 = vunpack.c.l.b16 %v344
        %v906 = vunpack.c.h.b16 %v344
        %v907 = vunpack.c.l.b16 %v345
        %v908 = vunpack.c.h.b16 %v345
        %v909 = vunpack.c.l.b16 %v346
        %v910 = vunpack.c.h.b16 %v346
        %v911 = vunpack.c.l.b16 %v347
        %v912 = vunpack.c.h.b16 %v347
        %v913 = vunpack.c.l.b16 %v348
        %v914 = vunpack.c.h.b16 %v348
        %v915 = vunpack.c.l.b16 %v349
        %v916 = vunpack.c.h.b16 %v349
        %v917 = vunpack.c.l.b16 %v350
        %v918 = vunpack.c.h.b16 %v350
        %v919 = vunpack.c.l.b16 %v351
        %v920 = vunpack.c.h.b16 %v351
        %v921 = vunpack.c.l.b16 %v352
        %v922 = vunpack.c.h.b16 %v352
        %v923 = vunpack.c.l.b16 %v353
        %v924 = vunpack.c.h.b16 %v353
        %v925 = vunpack.c.l.b16 %v354
        %v926 = vunpack.c.h.b16 %v354
        %v927 = vunpack.c.l.b16 %v355
        %v928 = vunpack.c.h.b16 %v355
        %v929 = vunpack.c.l.b16 %v356
        %v930 = vunpack.c.h.b16 %v356
        %v931 = vunpack.c.l.b16 %v357
        %v932 = vunpack.c.h.b16 %v357
        %v933 = vunpack.c.l.b16 %v358
        %v934 = vunpack.c.h.b16 %v358
        %v935 = vunpack.c.l.b16 %v359
        %v936 = vunpack.c.h.b16 %v359
        %v937 = vunpack.c.l.b16 %v360
        %v938 = vunpack.c.h.b16 %v360
        %v939 = vunpack.c.l.b16 %v361
        %v940 = vunpack.c.h.b16 %v361
        %v941 = vunpack.c.l.b16 %v362
        %v942 = vunpack.c.h.b16 %v362
        %v943 = vunpack.c.l.b16 %v363
        %v944 = vunpack.c.h.b16 %v363
        %v945 = vunpack.c.l.b16 %v364
        %v946 = vunpack.c.h.b16 %v364
        %v947 = vunpack.c.l.b16 %v365
        %v948 = vunpack.c.h.b16 %v365
        %v949 = vunpack.c.l.b16 %v366
        %v950 = vunpack.c.h.b16 %v366
        %v951 = vunpack.c.l.b16 %v367
        %v952 = vunpack.c.h.b16 %v367
        %v953 = vunpack.c.l.b16 %v368
        %v954 = vunpack.c.h.b16 %v368
        %v955 = vunpack.c.l.b16 %v369
        %v956 = vunpack.c.h.b16 %v369
        %v957 = vunpack.c.l.b16 %v370
        %v958 = vunpack.c.h.b16 %v370
        %v959 = vunpack.c.l.b16 %v371
        %v960 = vunpack.c.h.b16 %v371
        %v961 = vunpack.c.l.b16 %v372
        %v962 = vunpack.c.h.b16 %v372
        %v963 = vunpack.c.l.b16 %v373
        %v964 = vunpack.c.h.b16 %v373
        %v965 = vunpack.c.l.b16 %v374
        %v966 = vunpack.c.h.b16 %v374
        %v967 = vunpack.c.l.b16 %v375
        %v968 = vunpack.c.h.b16 %v375
        %v969 = vunpack.c.l.b16 %v376
        %v970 = vunpack.c.h.b16 %v376
        %v971 = vunpack.c.l.b16 %v377
        %v972 = vunpack.c.h.b16 %v377
        %v973 = vunpack.c.l.b16 %v378
        %v974 = vunpack.c.h.b16 %v378
        %v975 = vunpack.c.l.b16 %v379
        %v976 = vunpack.c.h.b16 %v379
        %v977 = vunpack.c.l.b16 %v380
        %v978 = vunpack.c.h.b16 %v380
        %v979 = vunpack.c.l.b16 %v381
        %v980 = vunpack.c.h.b16 %v381
        %v981 = vunpack.c.l.b16 %v382
        %v982 = vunpack.c.h.b16 %v382
        %v983 = vunpack.c.l.b16 %v383
        %v984 = vunpack.c.h.b16 %v383
        %v985 = vunpack.c.l.b16 %v384
        %v986 = vunpack.c.h.b16 %v384
        %v987 = vunpack.c.l.b16 %v385
        %v988 = vunpack.c.h.b16 %v385
        %v989 = vunpack.c.l.b16 %v386
        %v990 = vunpack.c.h.b16 %v386
        %v991 = vunpack.c.l.b16 %v387
        %v992 = vunpack.c.h.b16 %v387
        %v993 = vunpack.c.l.b16 %v388
        %v994 = vunpack.c.h.b16 %v388
        %v995 = vunpack.c.l.b16 %v389
        %v996 = vunpack.c.h.b16 %v389
        %v997 = vunpack.c.l.b16 %v390
        %v998 = vunpack.c.h.b16 %v390
        %v999 = vunpack.c.l.b16 %v391
        %v1000 = vunpack.c.h.b16 %v391
        %v1001 = vunpack.c.l.b16 %v392
        %v1002 = vunpack.c.h.b16 %v392
        %v1003 = vunpack.c.l.b16 %v393
        %v1004 = vunpack.c.h.b16 %v393
        %v1005 = vunpack.c.l.b16 %v394
        %v1006 = vunpack.c.h.b16 %v394
        %v1007 = vunpack.c.l.b16 %v395
        %v1008 = vunpack.c.h.b16 %v395
        %v1009 = vunpack.c.l.b16 %v396
        %v1010 = vunpack.c.h.b16 %v396
        %v1011 = vunpack.c.l.b16 %v397
        %v1012 = vunpack.c.h.b16 %v397
        %v1013 = vunpack.c.l.b16 %v398
        %v1014 = vunpack.c.h.b16 %v398
        %v1015 = vunpack.c.l.b16 %v399
        %v1016 = vunpack.c.h.b16 %v399
        %v1017 = vunpack.c.l.b16 %v400
        %v1018 = vunpack.c.h.b16 %v400
        %v1019 = vunpack.c.l.b16 %v401
        %v1020 = vunpack.c.h.b16 %v401
        %v1021 = vunpack.c.l.b16 %v402
        %v1022 = vunpack.c.h.b16 %v402
        %v1023 = vunpack.c.l.b16 %v403
        %v1024 = vunpack.c.h.b16 %v403
        %v1025 = vunpack.c.l.b16 %v404
        %v1026 = vunpack.c.h.b16 %v404
        %v1027 = vunpack.c.l.b16 %v405
        %v1028 = vunpack.c.h.b16 %v405
        %v1029 = vunpack.c.l.b16 %v406
        %v1030 = vunpack.c.h.b16 %v406
        %v1031 = vunpack.c.l.b16 %v407
        %v1032 = vunpack.c.h.b16 %v407
        %v1033 = vunpack.c.l.b16 %v408
        %v1034 = vunpack.c.h.b16 %v408
        %v1035 = vunpack.c.l.b16 %v409
        %v1036 = vunpack.c.h.b16 %v409
        %v1037 = vunpack.c.l.b16 %v410
        %v1038 = vunpack.c.h.b16 %v410
        %v1039 = vunpack.c.l.b16 %v411
        %v1040 = vunpack.c.h.b16 %v411
        %v1041 = vunpack.c.l.b16 %v412
        %v1042 = vunpack.c.h.b16 %v412
        %v1043 = vunpack.c.l.b16 %v413
        %v1044 = vunpack.c.h.b16 %v413
        %v1045 = vunpack.c.l.b16 %v414
        %v1046 = vunpack.c.h.b16 %v414
        %v1047 = vunpack.c.l.b16 %v415
        %v1048 = vunpack.c.h.b16 %v415
        %v1049 = vunpack.c.l.b16 %v416
        %v1050 = vunpack.c.h.b16 %v416
        %v1051 = vunpack.c.l.b16 %v417
        %v1052 = vunpack.c.h.b16 %v417
        %v1053 = vunpack.c.l.b16 %v418
        %v1054 = vunpack.c.h.b16 %v418
        %v1055 = vunpack.c.l.b16 %v419
        %v1056 = vunpack.c.h.b16 %v419
        %v1057 = vunpack.c.l.b16 %v420
        %v1058 = vunpack.c.h.b16 %v420
        %v1059 = vunpack.c.l.b16 %v421
        %v1060 = vunpack.c.h.b16 %v421
        %v1061 = vunpack.c.l.b16 %v422
        %v1062 = vunpack.c.h.b16 %v422
        %v1063 = vunpack.c.l.b16 %v423
        %v1064 = vunpack.c.h.b16 %v423
        %v1065 = vunpack.c.l.b16 %v424
        %v1066 = vunpack.c.h.b16 %v424
        %v1067 = vunpack.c.l.b16 %v425
        %v1068 = vunpack.c.h.b16 %v425
        %v1069 = vunpack.c.l.b16 %v426
        %v1070 = vunpack.c.h.b16 %v426
        %v1071 = vunpack.c.l.b16 %v427
        %v1072 = vunpack.c.h.b16 %v427
        %v1073 = vunpack.c.l.b16 %v428
        %v1074 = vunpack.c.h.b16 %v428
        %v1075 = vunpack.c.l.b16 %v429
        %v1076 = vunpack.c.h.b16 %v429
        %v1077 = vunpack.c.l.b16 %v430
        %v1078 = vunpack.c.h.b16 %v430
        %v1079 = vunpack.c.l.b16 %v431
        %v1080 = vunpack.c.h.b16 %v431
        %v1081 = vunpack.c.l.b16 %v432
        %v1082 = vunpack.c.h.b16 %v432
        %v1083 = vunpack.c.l.b16 %v433
        %v1084 = vunpack.c.h.b16 %v433
        %v1085 = vunpack.c.l.b16 %v434
        %v1086 = vunpack.c.h.b16 %v434
        %v1087 = vunpack.c.l.b16 %v435
        %v1088 = vunpack.c.h.b16 %v435
        %v1089 = vunpack.c.l.b16 %v436
        %v1090 = vunpack.c.h.b16 %v436
        %v1091 = vunpack.c.l.b16 %v437
        %v1092 = vunpack.c.h.b16 %v437
        %v1093 = vunpack.c.l.b16 %v438
        %v1094 = vunpack.c.h.b16 %v438
        %v1095 = vunpack.c.l.b16 %v439
        %v1096 = vunpack.c.h.b16 %v439
        %v1097 = vunpack.c.l.b16 %v440
        %v1098 = vunpack.c.h.b16 %v440
        %v1099 = vunpack.c.l.b16 %v441
        %v1100 = vunpack.c.h.b16 %v441
        %v1101 = vunpack.c.l.b16 %v442
        %v1102 = vunpack.c.h.b16 %v442
        %v1103 = vunpack.c.l.b16 %v443
        %v1104 = vunpack.c.h.b16 %v443
        %v1105 = vunpack.c.l.b16 %v444
        %v1106 = vunpack.c.h.b16 %v444
        %v1107 = vunpack.c.l.b16 %v445
        %v1108 = vunpack.c.h.b16 %v445
        %v1109 = vunpack.c.l.b16 %v446
        %v1110 = vunpack.c.h.b16 %v446
        %v1111 = vunpack.c.l.b16 %v447
        %v1112 = vunpack.c.h.b16 %v447
        %v1113 = vunpack.c.l.b16 %v448
        %v1114 = vunpack.c.h.b16 %v448
        %v1115 = vunpack.c.l.b16 %v449
        %v1116 = vunpack.c.h.b16 %v449
        %v1117 = vunpack.c.l.b16 %v450
        %v1118 = vunpack.c.h.b16 %v450
        %v1119 = vunpack.c.l.b16 %v451
        %v1120 = vunpack.c.h.b16 %v451
        %v1121 = vunpack.c.l.b16 %v452
        %v1122 = vunpack.c.h.b16 %v452
        %v1123 = vunpack.c.l.b16 %v453
        %v1124 = vunpack.c.h.b16 %v453
        %v1125 = vunpack.c.l.b16 %v454
        %v1126 = vunpack.c.h.b16 %v454
        %v1127 = vunpack.c.l.b16 %v455
        %v1128 = vunpack.c.h.b16 %v455
        %v1129 = vunpack.c.l.b16 %v456
        %v1130 = vunpack.c.h.b16 %v456
        %v1131 = vunpack.c.l.b16 %v457
        %v1132 = vunpack.c.h.b16 %v457
        %v1133 = vunpack.c.l.b16 %v458
        %v1134 = vunpack.c.h.b16 %v458
        %v1135 = vunpack.c.l.b16 %v459
        %v1136 = vunpack.c.h.b16 %v459
        %v1137 = vunpack.c.l.b16 %v460
        %v1138 = vunpack.c.h.b16 %v460
        %v1139 = vunpack.c.l.b16 %v461
        %v1140 = vunpack.c.h.b16 %v461
        %v1141 = vunpack.c.l.b16 %v462
        %v1142 = vunpack.c.h.b16 %v462
        %v1143 = vunpack.c.l.b16 %v463
        %v1144 = vunpack.c.h.b16 %v463
        %v1145 = vunpack.c.l.b16 %v464
        %v1146 = vunpack.c.h.b16 %v464
        %v1147 = vunpack.c.l.b16 %v465
        %v1148 = vunpack.c.h.b16 %v465
        %v1149 = vunpack.c.l.b16 %v466
        %v1150 = vunpack.c.h.b16 %v466
        %v1151 = vunpack.c.l.b16 %v467
        %v1152 = vunpack.c.h.b16 %v467
        %v1153 = vunpack.c.l.b16 %v468
        %v1154 = vunpack.c.h.b16 %v468
        %v1155 = vunpack.c.l.b16 %v469
        %v1156 = vunpack.c.h.b16 %v469
        %v1157 = vunpack.c.l.b16 %v470
        %v1158 = vunpack.c.h.b16 %v470
        %v1159 = vunpack.c.l.b16 %v471
        %v1160 = vunpack.c.h.b16 %v471
        %v1161 = vunpack.c.l.b16 %v472
        %v1162 = vunpack.c.h.b16 %v472
        %v1163 = vunpack.c.l.b16 %v473
        %v1164 = vunpack.c.h.b16 %v473
        %v1165 = vunpack.c.l.b16 %v474
        %v1166 = vunpack.c.h.b16 %v474
        %v1167 = vunpack.c.l.b16 %v475
        %v1168 = vunpack.c.h.b16 %v475
        %v1169 = vunpack.c.l.b16 %v476
        %v1170 = vunpack.c.h.b16 %v476
        %v1171 = vunpack.c.l.b16 %v477
        %v1172 = vunpack.c.h.b16 %v477
        %v1173 = vunpack.c.l.b16 %v478
        %v1174 = vunpack.c.h.b16 %v478
        %v1175 = vunpack.c.l.b16 %v479
        %v1176 = vunpack.c.h.b16 %v479
        %v1177 = vunpack.c.l.b16 %v480
        %v1178 = vunpack.c.h.b16 %v480
        %v1179 = vunpack.c.l.b16 %v481
        %v1180 = vunpack.c.h.b16 %v481
        %v1181 = vunpack.c.l.b16 %v482
        %v1182 = vunpack.c.h.b16 %v482
        %v1183 = vunpack.c.l.b16 %v483
        %v1184 = vunpack.c.h.b16 %v483
        %v1185 = vunpack.c.l.b16 %v484
        %v1186 = vunpack.c.h.b16 %v484
        %v1187 = vunpack.c.l.b16 %v485
        %v1188 = vunpack.c.h.b16 %v485
        %v1189 = vunpack.c.l.b16 %v486
        %v1190 = vunpack.c.h.b16 %v486
        %v1191 = vunpack.c.l.b16 %v487
        %v1192 = vunpack.c.h.b16 %v487
        %v1193 = vunpack.c.l.b16 %v488
        %v1194 = vunpack.c.h.b16 %v488
        %v1195 = vunpack.c.l.b16 %v489
        %v1196 = vunpack.c.h.b16 %v489
        %v1197 = vunpack.c.l.b16 %v490
        %v1198 = vunpack.c.h.b16 %v490
        %v1199 = vunpack.c.l.b16 %v491
        %v1200 = vunpack.c.h.b16 %v491
        %v1201 = vunpack.c.l.b16 %v492
        %v1202 = vunpack.c.h.b16 %v492
        %v1203 = vunpack.c.l.b16 %v493
        %v1204 = vunpack.c.h.b16 %v493
        %v1205 = vunpack.c.l.b16 %v494
        %v1206 = vunpack.c.h.b16 %v494
        %v1207 = vunpack.c.l.b16 %v495
        %v1208 = vunpack.c.h.b16 %v495
        %v1209 = vunpack.c.l.b16 %v496
        %v1210 = vunpack.c.h.b16 %v496
        %v1211 = vunpack.c.l.b16 %v497
        %v1212 = vunpack.c.h.b16 %v497
        %v1213 = vunpack.c.l.b16 %v498
        %v1214 = vunpack.c.h.b16 %v498
        %v1215 = vunpack.c.l.b16 %v499
        %v1216 = vunpack.c.h.b16 %v499
        %v1217 = vunpack.c.l.b16 %v500
        %v1218 = vunpack.c.h.b16 %v500
        %v1219 = vunpack.c.l.b16 %v501
        %v1220 = vunpack.c.h.b16 %v501
        %v1221 = vunpack.c.l.b16 %v502
        %v1222 = vunpack.c.h.b16 %v502
        %v1223 = vunpack.c.l.b16 %v503
        %v1224 = vunpack.c.h.b16 %v503
        %v1225 = vunpack.c.l.b16 %v504
        %v1226 = vunpack.c.h.b16 %v504
        %v1227 = vunpack.c.l.b16 %v505
        %v1228 = vunpack.c.h.b16 %v505
        %v1229 = vunpack.c.l.b16 %v506
        %v1230 = vunpack.c.h.b16 %v506
        %v1231 = vunpack.c.l.b16 %v507
        %v1232 = vunpack.c.h.b16 %v507
        %v1233 = vunpack.c.l.b16 %v508
        %v1234 = vunpack.c.h.b16 %v508
        %v1235 = vunpack.c.l.b16 %v509
        %v1236 = vunpack.c.h.b16 %v509
        %v1237 = vunpack.c.l.b16 %v510
        %v1238 = vunpack.c.h.b16 %v510
        %v1239 = vunpack.c.l.b16 %v511
        %v1240 = vunpack.c.h.b16 %v511
        %v1241 = vunpack.c.l.b16 %v512
        %v1242 = vunpack.c.h.b16 %v512
        %v1243 = vunpack.c.l.b16 %v513
        %v1244 = vunpack.c.h.b16 %v513
        %v1245 = vunpack.c.l.b16 %v514
        %v1246 = vunpack.c.h.b16 %v514
        %v1247 = vunpack.c.l.b16 %v515
        %v1248 = vunpack.c.h.b16 %v515
        %v1249 = vunpack.c.l.b16 %v516
        %v1250 = vunpack.c.h.b16 %v516
        %v1251 = vunpack.c.l.b16 %v517
        %v1252 = vunpack.c.h.b16 %v517
        %v1253 = vunpack.c.l.b16 %v518
        %v1254 = vunpack.c.h.b16 %v518
        %v1255 = vunpack.c.l.b16 %v519
        %v1256 = vunpack.c.h.b16 %v519
        %v1257 = vunpack.c.l.b16 %v520
        %v1258 = vunpack.c.h.b16 %v520
        %v1259 = vunpack.c.l.b16 %v521
        %v1260 = vunpack.c.h.b16 %v521
        %v1261 = vunpack.c.l.b16 %v522
        %v1262 = vunpack.c.h.b16 %v522
        %v1263 = vunpack.c.l.b16 %v523
        %v1264 = vunpack.c.h.b16 %v523
        %v1265 = vunpack.c.l.b16 %v524
        %v1266 = vunpack.c.h.b16 %v524
        %v1267 = vunpack.c.l.b16 %v525
        %v1268 = vunpack.c.h.b16 %v525
        %v1269 = vunpack.c.l.b16 %v526
        %v1270 = vunpack.c.h.b16 %v526
        %v1271 = vunpack.c.l.b16 %v527
        %v1272 = vunpack.c.h.b16 %v527
        %v1273 = vunpack.c.l.b16 %v528
        %v1274 = vunpack.c.h.b16 %v528
        %v1275 = vunpack.c.l.b16 %v529
        %v1276 = vunpack.c.h.b16 %v529
        %v1277 = vunpack.c.l.b16 %v530
        %v1278 = vunpack.c.h.b16 %v530
        %v1279 = vunpack.c.l.b16 %v531
        %v1280 = vunpack.c.h.b16 %v531
        %v1281 = vunpack.c.l.b16 %v532
        %v1282 = vunpack.c.h.b16 %v532
        %v1283 = vunpack.c.l.b16 %v533
        %v1284 = vunpack.c.h.b16 %v533
        %v1285 = vunpack.c.l.b16 %v534
        %v1286 = vunpack.c.h.b16 %v534
        %v1287 = vunpack.c.l.b16 %v535
        %v1288 = vunpack.c.h.b16 %v535
        %v1289 = vunpack.c.l.b16 %v536
        %v1290 = vunpack.c.h.b16 %v536
        %v1291 = vunpack.c.l.b16 %v537
        %v1292 = vunpack.c.h.b16 %v537
        %v1293 = vunpack.c.l.b16 %v538
        %v1294 = vunpack.c.h.b16 %v538
        %v1295 = vunpack.c.l.b16 %v539
        %v1296 = vunpack.c.h.b16 %v539
        %v1297 = vunpack.c.l.b16 %v540
        %v1298 = vunpack.c.h.b16 %v540
        %v1299 = vunpack.c.l.b16 %v541
        %v1300 = vunpack.c.h.b16 %v541
        %v1301 = vunpack.c.l.b16 %v542
        %v1302 = vunpack.c.h.b16 %v542
        %v1303 = vunpack.c.l.b16 %v543
        %v1304 = vunpack.c.h.b16 %v543
        %v1305 = vunpack.c.l.b16 %v544
        %v1306 = vunpack.c.h.b16 %v544
        %v1307 = vunpack.c.l.b16 %v545
        %v1308 = vunpack.c.h.b16 %v545
        %v1309 = vunpack.c.l.b16 %v546
        %v1310 = vunpack.c.h.b16 %v546
        %v1311 = vunpack.c.l.b16 %v547
        %v1312 = vunpack.c.h.b16 %v547
        %v1313 = vunpack.c.l.b16 %v548
        %v1314 = vunpack.c.h.b16 %v548
        %v1315 = vunpack.c.l.b16 %v549
        %v1316 = vunpack.c.h.b16 %v549
        %v1317 = vunpack.c.l.b16 %v550
        %v1318 = vunpack.c.h.b16 %v550
        %v1319 = vunpack.c.l.b16 %v551
        %v1320 = vunpack.c.h.b16 %v551
        %v1321 = vunpack.c.l.b16 %v552
        %v1322 = vunpack.c.h.b16 %v552
        %v1323 = vunpack.c.l.b16 %v553
        %v1324 = vunpack.c.h.b16 %v553
        %v1325 = vunpack.c.l.b16 %v554
        %v1326 = vunpack.c.h.b16 %v554
        %v1327 = vunpack.c.l.b16 %v555
        %v1328 = vunpack.c.h.b16 %v555
        %v1329 = vunpack.c.l.b16 %v556
        %v1330 = vunpack.c.h.b16 %v556
        %v1331 = vunpack.c.l.b16 %v557
        %v1332 = vunpack.c.h.b16 %v557
        %v1333 = vunpack.c.l.b16 %v558
        %v1334 = vunpack.c.h.b16 %v558
        %v1335 = vunpack.c.l.b16 %v559
        %v1336 = vunpack.c.h.b16 %v559
        %v1337 = vunpack.c.l.b16 %v560
        %v1338 = vunpack.c.h.b16 %v560
        %v1339 = vunpack.c.l.b16 %v561
        %v1340 = vunpack.c.h.b16 %v561
        %v1341 = vunpack.c.l.b16 %v562
        %v1342 = vunpack.c.h.b16 %v562
        %v1343 = vunpack.c.l.b16 %v563
        %v1344 = vunpack.c.h.b16 %v563
        %v1345 = vunpack.c.l.b16 %v564
        %v1346 = vunpack.c.h.b16 %v564
        %v1347 = vunpack.c.l.b16 %v565
        %v1348 = vunpack.c.h.b16 %v565
        %v1349 = vunpack.c.l.b16 %v566
        %v1350 = vunpack.c.h.b16 %v566
        %v1351 = vunpack.c.l.b16 %v567
        %v1352 = vunpack.c.h.b16 %v567
        %v1353 = vunpack.c.l.b16 %v568
        %v1354 = vunpack.c.h.b16 %v568
        %v1355 = vunpack.c.l.b16 %v569
        %v1356 = vunpack.c.h.b16 %v569
        %v1357 = vunpack.c.l.b16 %v570
        %v1358 = vunpack.c.h.b16 %v570
        %v1359 = vunpack.c.l.b16 %v571
        %v1360 = vunpack.c.h.b16 %v571
        %v1361 = vunpack.c.l.b16 %v572
        %v1362 = vunpack.c.h.b16 %v572
        %v1363 = vunpack.c.l.b16 %v573
        %v1364 = vunpack.c.h.b16 %v573
        %v1365 = vunpack.c.l.b16 %v574
        %v1366 = vunpack.c.h.b16 %v574
        %v1367 = vunpack.c.l.b16 %v575
        %v1368 = vunpack.c.h.b16 %v575
        %v1369 = vunpack.c.l.b16 %v576
        %v1370 = vunpack.c.h.b16 %v576
        %v1371 = vunpack.c.l.b16 %v577
        %v1372 = vunpack.c.h.b16 %v577
        %v1373 = vunpack.c.l.b16 %v578
        %v1374 = vunpack.c.h.b16 %v578
        %v1375 = vunpack.c.l.b16 %v579
        %v1376 = vunpack.c.h.b16 %v579
        %v1377 = vunpack.c.l.b16 %v580
        %v1378 = vunpack.c.h.b16 %v580
        %v1379 = vunpack.c.l.b16 %v581
        %v1380 = vunpack.c.h.b16 %v581
        %v1381 = vunpack.c.l.b16 %v582
        %v1382 = vunpack.c.h.b16 %v582
        %v1383 = vunpack.c.l.b16 %v583
        %v1384 = vunpack.c.h.b16 %v583
        %v1385 = vunpack.c.l.b16 %v584
        %v1386 = vunpack.c.h.b16 %v584
        %v1387 = vunpack.c.l.b16 %v585
        %v1388 = vunpack.c.h.b16 %v585
        %v1389 = vunpack.c.l.b16 %v586
        %v1390 = vunpack.c.h.b16 %v586
        %v1391 = vunpack.c.l.b16 %v587
        %v1392 = vunpack.c.h.b16 %v587
        %v1393 = vunpack.c.l.b16 %v588
        %v1394 = vunpack.c.h.b16 %v588
        %v1395 = vunpack.c.l.b16 %v589
        %v1396 = vunpack.c.h.b16 %v589
        %v1397 = vunpack.c.l.b16 %v590
        %v1398 = vunpack.c.h.b16 %v590
        %v1399 = vpack.c.b16 %v891, %v887
        %v1400 = vpack.c.b16 %v892, %v888
        %v1401 = vpack.c.b16 %v893, %v889
        %v1402 = vpack.c.b16 %v894, %v890
        %v1403 = vpack.c.b16 %v899, %v895
        %v1404 = vpack.c.b16 %v900, %v896
        %v1405 = vpack.c.b16 %v901, %v897
        %v1406 = vpack.c.b16 %v902, %v898
        %v1407 = vpack.c.b16 %v907, %v903
        %v1408 = vpack.c.b16 %v908, %v904
        %v1409 = vpack.c.b16 %v909, %v905
        %v1410 = vpack.c.b16 %v910, %v906
        %v1411 = vpack.c.b16 %v915, %v911
        %v1412 = vpack.c.b16 %v916, %v912
        %v1413 = vpack.c.b16 %v917, %v913
        %v1414 = vpack.c.b16 %v918, %v914
        %v1415 = vpack.c.b16 %v923, %v919
        %v1416 = vpack.c.b16 %v924, %v920
        %v1417 = vpack.c.b16 %v925, %v921
        %v1418 = vpack.c.b16 %v926, %v922
        %v1419 = vpack.c.b16 %v931, %v927
        %v1420 = vpack.c.b16 %v932, %v928
        %v1421 = vpack.c.b16 %v933, %v929
        %v1422 = vpack.c.b16 %v934, %v930
        %v1423 = vpack.c.b16 %v939, %v935
        %v1424 = vpack.c.b16 %v940, %v936
        %v1425 = vpack.c.b16 %v941, %v937
        %v1426 = vpack.c.b16 %v942, %v938
        %v1427 = vpack.c.b16 %v947, %v943
        %v1428 = vpack.c.b16 %v948, %v944
        %v1429 = vpack.c.b16 %v949, %v945
        %v1430 = vpack.c.b16 %v950, %v946
        %v1431 = vpack.c.b16 %v955, %v951
        %v1432 = vpack.c.b16 %v956, %v952
        %v1433 = vpack.c.b16 %v957, %v953
        %v1434 = vpack.c.b16 %v958, %v954
        %v1435 = vpack.c.b16 %v963, %v959
        %v1436 = vpack.c.b16 %v964, %v960
        %v1437 = vpack.c.b16 %v965, %v961
        %v1438 = vpack.c.b16 %v966, %v962
        %v1439 = vpack.c.b16 %v971, %v967
        %v1440 = vpack.c.b16 %v972, %v968
        %v1441 = vpack.c.b16 %v973, %v969
        %v1442 = vpack.c.b16 %v974, %v970
        %v1443 = vpack.c.b16 %v979, %v975
        %v1444 = vpack.c.b16 %v980, %v976
        %v1445 = vpack.c.b16 %v981, %v977
        %v1446 = vpack.c.b16 %v982, %v978
        %v1447 = vpack.c.b16 %v987, %v983
        %v1448 = vpack.c.b16 %v988, %v984
        %v1449 = vpack.c.b16 %v989, %v985
        %v1450 = vpack.c.b16 %v990, %v986
        %v1451 = vpack.c.b16 %v995, %v991
        %v1452 = vpack.c.b16 %v996, %v992
        %v1453 = vpack.c.b16 %v997, %v993
        %v1454 = vpack.c.b16 %v998, %v994
        %v1455 = vpack.c.b16 %v1003, %v999
        %v1456 = vpack.c.b16 %v1004, %v1000
        %v1457 = vpack.c.b16 %v1005, %v1001
        %v1458 = vpack.c.b16 %v1006, %v1002
        %v1459 = vpack.c.b16 %v1011, %v1007
        %v1460 = vpack.c.b16 %v1012, %v1008
        %v1461 = vpack.c.b16 %v1013, %v1009
        %v1462 = vpack.c.b16 %v1014, %v1010
        %v1463 = vpack.c.b16 %v1019, %v1015
        %v1464 = vpack.c.b16 %v1020, %v1016
        %v1465 = vpack.c.b16 %v1021, %v1017
        %v1466 = vpack.c.b16 %v1022, %v1018
        %v1467 = vpack.c.b16 %v1027, %v1023
        %v1468 = vpack.c.b16 %v1028, %v1024
        %v1469 = vpack.c.b16 %v1029, %v1025
        %v1470 = vpack.c.b16 %v1030, %v1026
        %v1471 = vpack.c.b16 %v1035, %v1031
        %v1472 = vpack.c.b16 %v1036, %v1032
        %v1473 = vpack.c.b16 %v1037, %v1033
        %v1474 = vpack.c.b16 %v1038, %v1034
        %v1475 = vpack.c.b16 %v1043, %v1039
        %v1476 = vpack.c.b16 %v1044, %v1040
        %v1477 = vpack.c.b16 %v1045, %v1041
        %v1478 = vpack.c.b16 %v1046, %v1042
        %v1479 = vpack.c.b16 %v1051, %v1047
        %v1480 = vpack.c.b16 %v1052, %v1048
        %v1481 = vpack.c.b16 %v1053, %v1049
        %v1482 = vpack.c.b16 %v1054, %v1050
        %v1483 = vpack.c.b16 %v1059, %v1055
        %v1484 = vpack.c.b16 %v1060, %v1056
        %v1485 = vpack.c.b16 %v1061, %v1057
        %v1486 = vpack.c.b16 %v1062, %v1058
        %v1487 = vpack.c.b16 %v1067, %v1063
        %v1488 = vpack.c.b16 %v1068, %v1064
        %v1489 = vpack.c.b16 %v1069, %v1065
        %v1490 = vpack.c.b16 %v1070, %v1066
        %v1491 = vpack.c.b16 %v1075, %v1071
        %v1492 = vpack.c.b16 %v1076, %v1072
        %v1493 = vpack.c.b16 %v1077, %v1073
        %v1494 = vpack.c.b16 %v1078, %v1074
        %v1495 = vpack.c.b16 %v1083, %v1079
        %v1496 = vpack.c.b16 %v1084, %v1080
        %v1497 = vpack.c.b16 %v1085, %v1081
        %v1498 = vpack.c.b16 %v1086, %v1082
        %v1499 = vpack.c.b16 %v1091, %v1087
        %v1500 = vpack.c.b16 %v1092, %v1088
        %v1501 = vpack.c.b16 %v1093, %v1089
        %v1502 = vpack.c.b16 %v1094, %v1090
        %v1503 = vpack.c.b16 %v1099, %v1095
        %v1504 = vpack.c.b16 %v1100, %v1096
        %v1505 = vpack.c.b16 %v1101, %v1097
        %v1506 = vpack.c.b16 %v1102, %v1098
        %v1507 = vpack.c.b16 %v1107, %v1103
        %v1508 = vpack.c.b16 %v1108, %v1104
        %v1509 = vpack.c.b16 %v1109, %v1105
        %v1510 = vpack.c.b16 %v1110, %v1106
        %v1511 = vpack.c.b16 %v1115, %v1111
        %v1512 = vpack.c.b16 %v1116, %v1112
        %v1513 = vpack.c.b16 %v1117, %v1113
        %v1514 = vpack.c.b16 %v1118, %v1114
        %v1515 = vpack.c.b16 %v1123, %v1119
        %v1516 = vpack.c.b16 %v1124, %v1120
        %v1517 = vpack.c.b16 %v1125, %v1121
        %v1518 = vpack.c.b16 %v1126, %v1122
        %v1519 = vpack.c.b16 %v1131, %v1127
        %v1520 = vpack.c.b16 %v1132, %v1128
        %v1521 = vpack.c.b16 %v1133, %v1129
        %v1522 = vpack.c.b16 %v1134, %v1130
        %v1523 = vpack.c.b16 %v1139, %v1135
        %v1524 = vpack.c.b16 %v1140, %v1136
        %v1525 = vpack.c.b16 %v1141, %v1137
        %v1526 = vpack.c.b16 %v1142, %v1138
        %v1527 = vpack.c.b16 %v1147, %v1143
        %v1528 = vpack.c.b16 %v1148, %v1144
        %v1529 = vpack.c.b16 %v1149, %v1145
        %v1530 = vpack.c.b16 %v1150, %v1146
        %v1531 = vpack.c.b16 %v1155, %v1151
        %v1532 = vpack.c.b16 %v1156, %v1152
        %v1533 = vpack.c.b16 %v1157, %v1153
        %v1534 = vpack.c.b16 %v1158, %v1154
        %v1535 = vpack.c.b16 %v1163, %v1159
        %v1536 = vpack.c.b16 %v1164, %v1160
        %v1537 = vpack.c.b16 %v1165, %v1161
        %v1538 = vpack.c.b16 %v1166, %v1162
        %v1539 = vpack.c.b16 %v1171, %v1167
        %v1540 = vpack.c.b16 %v1172, %v1168
        %v1541 = vpack.c.b16 %v1173, %v1169
        %v1542 = vpack.c.b16 %v1174, %v1170
        %v1543 = vpack.c.b16 %v1179, %v1175
        %v1544 = vpack.c.b16 %v1180, %v1176
        %v1545 = vpack.c.b16 %v1181, %v1177
        %v1546 = vpack.c.b16 %v1182, %v1178
        %v1547 = vpack.c.b16 %v1187, %v1183
        %v1548 = vpack.c.b16 %v1188, %v1184
        %v1549 = vpack.c.b16 %v1189, %v1185
        %v1550 = vpack.c.b16 %v1190, %v1186
        %v1551 = vpack.c.b16 %v1195, %v1191
        %v1552 = vpack.c.b16 %v1196, %v1192
        %v1553 = vpack.c.b16 %v1197, %v1193
        %v1554 = vpack.c.b16 %v1198, %v1194
        %v1555 = vpack.c.b16 %v1203, %v1199
        %v1556 = vpack.c.b16 %v1204, %v1200
        %v1557 = vpack.c.b16 %v1205, %v1201
        %v1558 = vpack.c.b16 %v1206, %v1202
        %v1559 = vpack.c.b16 %v1211, %v1207
        %v1560 = vpack.c.b16 %v1212, %v1208
        %v1561 = vpack.c.b16 %v1213, %v1209
        %v1562 = vpack.c.b16 %v1214, %v1210
        %v1563 = vpack.c.b16 %v1219, %v1215
        %v1564 = vpack.c.b16 %v1220, %v1216
        %v1565 = vpack.c.b16 %v1221, %v1217
        %v1566 = vpack.c.b16 %v1222, %v1218
        %v1567 = vpack.c.b16 %v1227, %v1223
        %v1568 = vpack.c.b16 %v1228, %v1224
        %v1569 = vpack.c.b16 %v1229, %v1225
        %v1570 = vpack.c.b16 %v1230, %v1226
        %v1571 = vpack.c.b16 %v1235, %v1231
        %v1572 = vpack.c.b16 %v1236, %v1232
        %v1573 = vpack.c.b16 %v1237, %v1233
        %v1574 = vpack.c.b16 %v1238, %v1234
        %v1575 = vpack.c.b16 %v1243, %v1239
        %v1576 = vpack.c.b16 %v1244, %v1240
        %v1577 = vpack.c.b16 %v1245, %v1241
        %v1578 = vpack.c.b16 %v1246, %v1242
        %v1579 = vpack.c.b16 %v1251, %v1247
        %v1580 = vpack.c.b16 %v1252, %v1248
        %v1581 = vpack.c.b16 %v1253, %v1249
        %v1582 = vpack.c.b16 %v1254, %v1250
        %v1583 = vpack.c.b16 %v1259, %v1255
        %v1584 = vpack.c.b16 %v1260, %v1256
        %v1585 = vpack.c.b16 %v1261, %v1257
        %v1586 = vpack.c.b16 %v1262, %v1258
        %v1587 = vpack.c.b16 %v1267, %v1263
        %v1588 = vpack.c.b16 %v1268, %v1264
        %v1589 = vpack.c.b16 %v1269, %v1265
        %v1590 = vpack.c.b16 %v1270, %v1266
        %v1591 = vpack.c.b16 %v1275, %v1271
        %v1592 = vpack.c.b16 %v1276, %v1272
        %v1593 = vpack.c.b16 %v1277, %v1273
        %v1594 = vpack.c.b16 %v1278, %v1274
        %v1595 = vpack.c.b16 %v1283, %v1279
        %v1596 = vpack.c.b16 %v1284, %v1280
        %v1597 = vpack.c.b16 %v1285, %v1281
        %v1598 = vpack.c.b16 %v1286, %v1282
        %v1599 = vpack.c.b16 %v1291, %v1287
        %v1600 = vpack.c.b16 %v1292, %v1288
        %v1601 = vpack.c.b16 %v1293, %v1289
        %v1602 = vpack.c.b16 %v1294, %v1290
        %v1603 = vpack.c.b16 %v1299, %v1295
        %v1604 = vpack.c.b16 %v1300, %v1296
        %v1605 = vpack.c.b16 %v1301, %v1297
        %v1606 = vpack.c.b16 %v1302, %v1298
        %v1607 = vpack.c.b16 %v1307, %v1303
        %v1608 = vpack.c.b16 %v1308, %v1304
        %v1609 = vpack.c.b16 %v1309, %v1305
        %v1610 = vpack.c.b16 %v1310, %v1306
        %v1611 = vpack.c.b16 %v1315, %v1311
        %v1612 = vpack.c.b16 %v1316, %v1312
        %v1613 = vpack.c.b16 %v1317, %v1313
        %v1614 = vpack.c.b16 %v1318, %v1314
        %v1615 = vpack.c.b16 %v1323, %v1319
        %v1616 = vpack.c.b16 %v1324, %v1320
        %v1617 = vpack.c.b16 %v1325, %v1321
        %v1618 = vpack.c.b16 %v1326, %v1322
        %v1619 = vpack.c.b16 %v1331, %v1327
        %v1620 = vpack.c.b16 %v1332, %v1328
        %v1621 = vpack.c.b16 %v1333, %v1329
        %v1622 = vpack.c.b16 %v1334, %v1330
        %v1623 = vpack.c.b16 %v1339, %v1335
        %v1624 = vpack.c.b16 %v1340, %v1336
        %v1625 = vpack.c.b16 %v1341, %v1337
        %v1626 = vpack.c.b16 %v1342, %v1338
        %v1627 = vpack.c.b16 %v1347, %v1343
        %v1628 = vpack.c.b16 %v1348, %v1344
        %v1629 = vpack.c.b16 %v1349, %v1345
        %v1630 = vpack.c.b16 %v1350, %v1346
        %v1631 = vpack.c.b16 %v1355, %v1351
        %v1632 = vpack.c.b16 %v1356, %v1352
        %v1633 = vpack.c.b16 %v1357, %v1353
        %v1634 = vpack.c.b16 %v1358, %v1354
        %v1635 = vpack.c.b16 %v1363, %v1359
        %v1636 = vpack.c.b16 %v1364, %v1360
        %v1637 = vpack.c.b16 %v1365, %v1361
        %v1638 = vpack.c.b16 %v1366, %v1362
        %v1639 = vpack.c.b16 %v1371, %v1367
        %v1640 = vpack.c.b16 %v1372, %v1368
        %v1641 = vpack.c.b16 %v1373, %v1369
        %v1642 = vpack.c.b16 %v1374, %v1370
        %v1643 = vpack.c.b16 %v1379, %v1375
        %v1644 = vpack.c.b16 %v1380, %v1376
        %v1645 = vpack.c.b16 %v1381, %v1377
        %v1646 = vpack.c.b16 %v1382, %v1378
        %v1647 = vpack.c.b16 %v1387, %v1383
        %v1648 = vpack.c.b16 %v1388, %v1384
        %v1649 = vpack.c.b16 %v1389, %v1385
        %v1650 = vpack.c.b16 %v1390, %v1386
        %v1651 = vpack.c.b16 %v1395, %v1391
        %v1652 = vpack.c.b16 %v1396, %v1392
        %v1653 = vpack.c.b16 %v1397, %v1393
        %v1654 = vpack.c.b16 %v1398, %v1394
        %1911 = vmatprep.subr.bf16.mxu0 %v1428
        %1912 = vmatpush1.bf16.msra.mxu0 %v1427
        %1913 = vmatprep.subr.bf16.mxu0 %v1424
        %1914 = vmatpush1.bf16.msra.mxu0 %v1423
        %1915 = vmatprep.subr.bf16.mxu0 %v1420
        %1916 = vmatpush1.bf16.msra.mxu0 %v1419
        %1917 = vmatprep.subr.bf16.mxu0 %v1416
        %1918 = vmatpush1.bf16.msra.mxu0 %v1415
        %1919 = vmatprep.subr.bf16.mxu0 %v1412
        %1920 = vmatpush1.bf16.msra.mxu0 %v1411
        %1921 = vmatprep.subr.bf16.mxu0 %v1408
        %1922 = vmatpush1.bf16.msra.mxu0 %v1407
        %1923 = vmatprep.subr.bf16.mxu0 %v1404
        %1924 = vmatpush1.bf16.msra.mxu0 %v1403
        %1925 = vmatprep.subr.bf16.mxu0 %v1400
        %1926 = vmatpush1.bf16.msra.mxu0 %v1399
        %1927 = vmatprep.subr.bf16.mxu0 %v1460
        %1928 = vmatpush2.bf16.msra.mxu0 %v1459
        %1929 = vmatprep.subr.bf16.mxu0 %v1456
        %1930 = vmatpush2.bf16.msra.mxu0 %v1455
        %1931 = vmatprep.subr.bf16.mxu0 %v1452
        %1932 = vmatpush2.bf16.msra.mxu0 %v1451
        %1933 = vmatprep.subr.bf16.mxu0 %v1448
        %1934 = vmatpush2.bf16.msra.mxu0 %v1447
        %1935 = vmatprep.subr.bf16.mxu0 %v1444
        %1936 = vmatpush2.bf16.msra.mxu0 %v1443
        %1937 = vmatprep.subr.bf16.mxu0 %v1440
        %1938 = vmatpush2.bf16.msra.mxu0 %v1439
        %1939 = vmatprep.subr.bf16.mxu0 %v1436
        %1940 = vmatpush2.bf16.msra.mxu0 %v1435
        %1941 = vmatprep.subr.bf16.mxu0 %v1432
        %1942 = vmatpush2.bf16.msra.mxu0 %v1431
        %1943 = vmatprep.mubr.bf16.mxu0 %v616
        %1944 = vmatmul.mubr.bf16.gmra.mxu0 %v615
        %v1945 = vpop.f32.mrf.mxu0
        %v1946 = vadd.f32 0.0, %v1945
        %v1947 = vpop.f32.mrf.mxu0
        %v1948 = vadd.f32 0.0, %v1947
        %v1949 = vpop.f32.mrf.mxu0
        %v1950 = vadd.f32 0.0, %v1949
        %v1951 = vpop.f32.mrf.mxu0
        %v1952 = vadd.f32 0.0, %v1951
        %1953 = vdwg.mxu0
        %1954 = vmatprep.subr.bf16.mxu0 %v1492
        %1955 = vmatpush1.bf16.msra.mxu0 %v1491
        %1956 = vmatprep.subr.bf16.mxu0 %v1488
        %1957 = vmatpush1.bf16.msra.mxu0 %v1487
        %1958 = vmatprep.subr.bf16.mxu0 %v1484
        %1959 = vmatpush1.bf16.msra.mxu0 %v1483
        %1960 = vmatprep.subr.bf16.mxu0 %v1480
        %1961 = vmatpush1.bf16.msra.mxu0 %v1479
        %1962 = vmatprep.subr.bf16.mxu0 %v1476
        %1963 = vmatpush1.bf16.msra.mxu0 %v1475
        %1964 = vmatprep.subr.bf16.mxu0 %v1472
        %1965 = vmatpush1.bf16.msra.mxu0 %v1471
        %1966 = vmatprep.subr.bf16.mxu0 %v1468
        %1967 = vmatpush1.bf16.msra.mxu0 %v1467
        %1968 = vmatprep.subr.bf16.mxu0 %v1464
        %1969 = vmatpush1.bf16.msra.mxu0 %v1463
        %1970 = vmatprep.subr.bf16.mxu0 %v1524
        %1971 = vmatpush2.bf16.msra.mxu0 %v1523
        %1972 = vmatprep.subr.bf16.mxu0 %v1520
        %1973 = vmatpush2.bf16.msra.mxu0 %v1519
        %1974 = vmatprep.subr.bf16.mxu0 %v1516
        %1975 = vmatpush2.bf16.msra.mxu0 %v1515
        %1976 = vmatprep.subr.bf16.mxu0 %v1512
        %1977 = vmatpush2.bf16.msra.mxu0 %v1511
        %1978 = vmatprep.subr.bf16.mxu0 %v1508
        %1979 = vmatpush2.bf16.msra.mxu0 %v1507
        %1980 = vmatprep.subr.bf16.mxu0 %v1504
        %1981 = vmatpush2.bf16.msra.mxu0 %v1503
        %1982 = vmatprep.subr.bf16.mxu0 %v1500
        %1983 = vmatpush2.bf16.msra.mxu0 %v1499
        %1984 = vmatprep.subr.bf16.mxu0 %v1496
        %1985 = vmatpush2.bf16.msra.mxu0 %v1495
        %1986 = vmatprep.mubr.bf16.mxu0 %v618
        %1987 = vmatmul.mubr.bf16.gmra.mxu0 %v617
        %v1988 = vpop.f32.mrf.mxu0
        %v1989 = vadd.f32 %v1946, %v1988
        %v1990 = vpop.f32.mrf.mxu0
        %v1991 = vadd.f32 %v1948, %v1990
        %v1992 = vpop.f32.mrf.mxu0
        %v1993 = vadd.f32 %v1950, %v1992
        %v1994 = vpop.f32.mrf.mxu0
        %v1995 = vadd.f32 %v1952, %v1994
        %1996 = vdwg.mxu0
        %1997 = vmatprep.subr.bf16.mxu0 %v1556
        %1998 = vmatpush1.bf16.msra.mxu0 %v1555
        %1999 = vmatprep.subr.bf16.mxu0 %v1552
        %2000 = vmatpush1.bf16.msra.mxu0 %v1551
        %2001 = vmatprep.subr.bf16.mxu0 %v1548
        %2002 = vmatpush1.bf16.msra.mxu0 %v1547
        %2003 = vmatprep.subr.bf16.mxu0 %v1544
        %2004 = vmatpush1.bf16.msra.mxu0 %v1543
        %2005 = vmatprep.subr.bf16.mxu0 %v1540
        %2006 = vmatpush1.bf16.msra.mxu0 %v1539
        %2007 = vmatprep.subr.bf16.mxu0 %v1536
        %2008 = vmatpush1.bf16.msra.mxu0 %v1535
        %2009 = vmatprep.subr.bf16.mxu0 %v1532
        %2010 = vmatpush1.bf16.msra.mxu0 %v1531
        %2011 = vmatprep.subr.bf16.mxu0 %v1528
        %2012 = vmatpush1.bf16.msra.mxu0 %v1527
        %2013 = vmatprep.subr.bf16.mxu0 %v1588
        %2014 = vmatpush2.bf16.msra.mxu0 %v1587
        %2015 = vmatprep.subr.bf16.mxu0 %v1584
        %2016 = vmatpush2.bf16.msra.mxu0 %v1583
        %2017 = vmatprep.subr.bf16.mxu0 %v1580
        %2018 = vmatpush2.bf16.msra.mxu0 %v1579
        %2019 = vmatprep.subr.bf16.mxu0 %v1576
        %2020 = vmatpush2.bf16.msra.mxu0 %v1575
        %2021 = vmatprep.subr.bf16.mxu0 %v1572
        %2022 = vmatpush2.bf16.msra.mxu0 %v1571
        %2023 = vmatprep.subr.bf16.mxu0 %v1568
        %2024 = vmatpush2.bf16.msra.mxu0 %v1567
        %2025 = vmatprep.subr.bf16.mxu0 %v1564
        %2026 = vmatpush2.bf16.msra.mxu0 %v1563
        %2027 = vmatprep.subr.bf16.mxu0 %v1560
        %2028 = vmatpush2.bf16.msra.mxu0 %v1559
        %2029 = vmatprep.mubr.bf16.mxu0 %v620
        %2030 = vmatmul.mubr.bf16.gmra.mxu0 %v619
        %v2031 = vpop.f32.mrf.mxu0
        %v2032 = vadd.f32 %v1989, %v2031
        %v2033 = vpop.f32.mrf.mxu0
        %v2034 = vadd.f32 %v1991, %v2033
        %v2035 = vpop.f32.mrf.mxu0
        %v2036 = vadd.f32 %v1993, %v2035
        %v2037 = vpop.f32.mrf.mxu0
        %v2038 = vadd.f32 %v1995, %v2037
        %2039 = vdwg.mxu0
        %2040 = vmatprep.subr.bf16.mxu0 %v1620
        %2041 = vmatpush1.bf16.msra.mxu0 %v1619
        %2042 = vmatprep.subr.bf16.mxu0 %v1616
        %2043 = vmatpush1.bf16.msra.mxu0 %v1615
        %2044 = vmatprep.subr.bf16.mxu0 %v1612
        %2045 = vmatpush1.bf16.msra.mxu0 %v1611
        %2046 = vmatprep.subr.bf16.mxu0 %v1608
        %2047 = vmatpush1.bf16.msra.mxu0 %v1607
        %2048 = vmatprep.subr.bf16.mxu0 %v1604
        %2049 = vmatpush1.bf16.msra.mxu0 %v1603
        %2050 = vmatprep.subr.bf16.mxu0 %v1600
        %2051 = vmatpush1.bf16.msra.mxu0 %v1599
        %2052 = vmatprep.subr.bf16.mxu0 %v1596
        %2053 = vmatpush1.bf16.msra.mxu0 %v1595
        %2054 = vmatprep.subr.bf16.mxu0 %v1592
        %2055 = vmatpush1.bf16.msra.mxu0 %v1591
        %2056 = vmatprep.subr.bf16.mxu0 %v1652
        %2057 = vmatpush2.bf16.msra.mxu0 %v1651
        %2058 = vmatprep.subr.bf16.mxu0 %v1648
        %2059 = vmatpush2.bf16.msra.mxu0 %v1647
        %2060 = vmatprep.subr.bf16.mxu0 %v1644
        %2061 = vmatpush2.bf16.msra.mxu0 %v1643
        %2062 = vmatprep.subr.bf16.mxu0 %v1640
        %2063 = vmatpush2.bf16.msra.mxu0 %v1639
        %2064 = vmatprep.subr.bf16.mxu0 %v1636
        %2065 = vmatpush2.bf16.msra.mxu0 %v1635
        %2066 = vmatprep.subr.bf16.mxu0 %v1632
        %2067 = vmatpush2.bf16.msra.mxu0 %v1631
        %2068 = vmatprep.subr.bf16.mxu0 %v1628
        %2069 = vmatpush2.bf16.msra.mxu0 %v1627
        %2070 = vmatprep.subr.bf16.mxu0 %v1624
        %2071 = vmatpush2.bf16.msra.mxu0 %v1623
        %2072 = vmatprep.mubr.bf16.mxu0 %v622
        %2073 = vmatmul.mubr.bf16.gmra.mxu0 %v621
        %v2074 = vpop.f32.mrf.mxu0
        %v2075 = vadd.f32 %v2032, %v2074
        %v2076 = vpop.f32.mrf.mxu0
        %v2077 = vadd.f32 %v2034, %v2076
        %v2078 = vpop.f32.mrf.mxu0
        %v2079 = vadd.f32 %v2036, %v2078
        %v2080 = vpop.f32.mrf.mxu0
        %v2081 = vadd.f32 %v2038, %v2080
        %2082 = vdwg.mxu0
        %2083 = vmatprep.subr.bf16.mxu0 %v1430
        %2084 = vmatpush1.bf16.msra.mxu0 %v1429
        %2085 = vmatprep.subr.bf16.mxu0 %v1426
        %2086 = vmatpush1.bf16.msra.mxu0 %v1425
        %2087 = vmatprep.subr.bf16.mxu0 %v1422
        %2088 = vmatpush1.bf16.msra.mxu0 %v1421
        %2089 = vmatprep.subr.bf16.mxu0 %v1418
        %2090 = vmatpush1.bf16.msra.mxu0 %v1417
        %2091 = vmatprep.subr.bf16.mxu0 %v1414
        %2092 = vmatpush1.bf16.msra.mxu0 %v1413
        %2093 = vmatprep.subr.bf16.mxu0 %v1410
        %2094 = vmatpush1.bf16.msra.mxu0 %v1409
        %2095 = vmatprep.subr.bf16.mxu0 %v1406
        %2096 = vmatpush1.bf16.msra.mxu0 %v1405
        %2097 = vmatprep.subr.bf16.mxu0 %v1402
        %2098 = vmatpush1.bf16.msra.mxu0 %v1401
        %2099 = vmatprep.subr.bf16.mxu0 %v1462
        %2100 = vmatpush2.bf16.msra.mxu0 %v1461
        %2101 = vmatprep.subr.bf16.mxu0 %v1458
        %2102 = vmatpush2.bf16.msra.mxu0 %v1457
        %2103 = vmatprep.subr.bf16.mxu0 %v1454
        %2104 = vmatpush2.bf16.msra.mxu0 %v1453
        %2105 = vmatprep.subr.bf16.mxu0 %v1450
        %2106 = vmatpush2.bf16.msra.mxu0 %v1449
        %2107 = vmatprep.subr.bf16.mxu0 %v1446
        %2108 = vmatpush2.bf16.msra.mxu0 %v1445
        %2109 = vmatprep.subr.bf16.mxu0 %v1442
        %2110 = vmatpush2.bf16.msra.mxu0 %v1441
        %2111 = vmatprep.subr.bf16.mxu0 %v1438
        %2112 = vmatpush2.bf16.msra.mxu0 %v1437
        %2113 = vmatprep.subr.bf16.mxu0 %v1434
        %2114 = vmatpush2.bf16.msra.mxu0 %v1433
        %2115 = vmatprep.mubr.bf16.mxu0 %v616
        %2116 = vmatmul.mubr.bf16.gmra.mxu0 %v615
        %v2117 = vpop.f32.mrf.mxu0
        %v2118 = vadd.f32 0.0, %v2117
        %v2119 = vpop.f32.mrf.mxu0
        %v2120 = vadd.f32 0.0, %v2119
        %v2121 = vpop.f32.mrf.mxu0
        %v2122 = vadd.f32 0.0, %v2121
        %v2123 = vpop.f32.mrf.mxu0
        %v2124 = vadd.f32 0.0, %v2123
        %2125 = vdwg.mxu0
        %2126 = vmatprep.subr.bf16.mxu0 %v1494
        %2127 = vmatpush1.bf16.msra.mxu0 %v1493
        %2128 = vmatprep.subr.bf16.mxu0 %v1490
        %2129 = vmatpush1.bf16.msra.mxu0 %v1489
        %2130 = vmatprep.subr.bf16.mxu0 %v1486
        %2131 = vmatpush1.bf16.msra.mxu0 %v1485
        %2132 = vmatprep.subr.bf16.mxu0 %v1482
        %2133 = vmatpush1.bf16.msra.mxu0 %v1481
        %2134 = vmatprep.subr.bf16.mxu0 %v1478
        %2135 = vmatpush1.bf16.msra.mxu0 %v1477
        %2136 = vmatprep.subr.bf16.mxu0 %v1474
        %2137 = vmatpush1.bf16.msra.mxu0 %v1473
        %2138 = vmatprep.subr.bf16.mxu0 %v1470
        %2139 = vmatpush1.bf16.msra.mxu0 %v1469
        %2140 = vmatprep.subr.bf16.mxu0 %v1466
        %2141 = vmatpush1.bf16.msra.mxu0 %v1465
        %2142 = vmatprep.subr.bf16.mxu0 %v1526
        %2143 = vmatpush2.bf16.msra.mxu0 %v1525
        %2144 = vmatprep.subr.bf16.mxu0 %v1522
        %2145 = vmatpush2.bf16.msra.mxu0 %v1521
        %2146 = vmatprep.subr.bf16.mxu0 %v1518
        %2147 = vmatpush2.bf16.msra.mxu0 %v1517
        %2148 = vmatprep.subr.bf16.mxu0 %v1514
        %2149 = vmatpush2.bf16.msra.mxu0 %v1513
        %2150 = vmatprep.subr.bf16.mxu0 %v1510
        %2151 = vmatpush2.bf16.msra.mxu0 %v1509
        %2152 = vmatprep.subr.bf16.mxu0 %v1506
        %2153 = vmatpush2.bf16.msra.mxu0 %v1505
        %2154 = vmatprep.subr.bf16.mxu0 %v1502
        %2155 = vmatpush2.bf16.msra.mxu0 %v1501
        %2156 = vmatprep.subr.bf16.mxu0 %v1498
        %2157 = vmatpush2.bf16.msra.mxu0 %v1497
        %2158 = vmatprep.mubr.bf16.mxu0 %v618
        %2159 = vmatmul.mubr.bf16.gmra.mxu0 %v617
        %v2160 = vpop.f32.mrf.mxu0
        %v2161 = vadd.f32 %v2118, %v2160
        %v2162 = vpop.f32.mrf.mxu0
        %v2163 = vadd.f32 %v2120, %v2162
        %v2164 = vpop.f32.mrf.mxu0
        %v2165 = vadd.f32 %v2122, %v2164
        %v2166 = vpop.f32.mrf.mxu0
        %v2167 = vadd.f32 %v2124, %v2166
        %2168 = vdwg.mxu0
        %2169 = vmatprep.subr.bf16.mxu0 %v1558
        %2170 = vmatpush1.bf16.msra.mxu0 %v1557
        %2171 = vmatprep.subr.bf16.mxu0 %v1554
        %2172 = vmatpush1.bf16.msra.mxu0 %v1553
        %2173 = vmatprep.subr.bf16.mxu0 %v1550
        %2174 = vmatpush1.bf16.msra.mxu0 %v1549
        %2175 = vmatprep.subr.bf16.mxu0 %v1546
        %2176 = vmatpush1.bf16.msra.mxu0 %v1545
        %2177 = vmatprep.subr.bf16.mxu0 %v1542
        %2178 = vmatpush1.bf16.msra.mxu0 %v1541
        %2179 = vmatprep.subr.bf16.mxu0 %v1538
        %2180 = vmatpush1.bf16.msra.mxu0 %v1537
        %2181 = vmatprep.subr.bf16.mxu0 %v1534
        %2182 = vmatpush1.bf16.msra.mxu0 %v1533
        %2183 = vmatprep.subr.bf16.mxu0 %v1530
        %2184 = vmatpush1.bf16.msra.mxu0 %v1529
        %2185 = vmatprep.subr.bf16.mxu0 %v1590
        %2186 = vmatpush2.bf16.msra.mxu0 %v1589
        %2187 = vmatprep.subr.bf16.mxu0 %v1586
        %2188 = vmatpush2.bf16.msra.mxu0 %v1585
        %2189 = vmatprep.subr.bf16.mxu0 %v1582
        %2190 = vmatpush2.bf16.msra.mxu0 %v1581
        %2191 = vmatprep.subr.bf16.mxu0 %v1578
        %2192 = vmatpush2.bf16.msra.mxu0 %v1577
        %2193 = vmatprep.subr.bf16.mxu0 %v1574
        %2194 = vmatpush2.bf16.msra.mxu0 %v1573
        %2195 = vmatprep.subr.bf16.mxu0 %v1570
        %2196 = vmatpush2.bf16.msra.mxu0 %v1569
        %2197 = vmatprep.subr.bf16.mxu0 %v1566
        %2198 = vmatpush2.bf16.msra.mxu0 %v1565
        %2199 = vmatprep.subr.bf16.mxu0 %v1562
        %2200 = vmatpush2.bf16.msra.mxu0 %v1561
        %2201 = vmatprep.mubr.bf16.mxu0 %v620
        %2202 = vmatmul.mubr.bf16.gmra.mxu0 %v619
        %v2203 = vpop.f32.mrf.mxu0
        %v2204 = vadd.f32 %v2161, %v2203
        %v2205 = vpop.f32.mrf.mxu0
        %v2206 = vadd.f32 %v2163, %v2205
        %v2207 = vpop.f32.mrf.mxu0
        %v2208 = vadd.f32 %v2165, %v2207
        %v2209 = vpop.f32.mrf.mxu0
        %v2210 = vadd.f32 %v2167, %v2209
        %2211 = vdwg.mxu0
        %2212 = vmatprep.subr.bf16.mxu0 %v1622
        %2213 = vmatpush1.bf16.msra.mxu0 %v1621
        %2214 = vmatprep.subr.bf16.mxu0 %v1618
        %2215 = vmatpush1.bf16.msra.mxu0 %v1617
        %2216 = vmatprep.subr.bf16.mxu0 %v1614
        %2217 = vmatpush1.bf16.msra.mxu0 %v1613
        %2218 = vmatprep.subr.bf16.mxu0 %v1610
        %2219 = vmatpush1.bf16.msra.mxu0 %v1609
        %2220 = vmatprep.subr.bf16.mxu0 %v1606
        %2221 = vmatpush1.bf16.msra.mxu0 %v1605
        %2222 = vmatprep.subr.bf16.mxu0 %v1602
        %2223 = vmatpush1.bf16.msra.mxu0 %v1601
        %2224 = vmatprep.subr.bf16.mxu0 %v1598
        %2225 = vmatpush1.bf16.msra.mxu0 %v1597
        %2226 = vmatprep.subr.bf16.mxu0 %v1594
        %2227 = vmatpush1.bf16.msra.mxu0 %v1593
        %2228 = vmatprep.subr.bf16.mxu0 %v1654
        %2229 = vmatpush2.bf16.msra.mxu0 %v1653
        %2230 = vmatprep.subr.bf16.mxu0 %v1650
        %2231 = vmatpush2.bf16.msra.mxu0 %v1649
        %2232 = vmatprep.subr.bf16.mxu0 %v1646
        %2233 = vmatpush2.bf16.msra.mxu0 %v1645
        %2234 = vmatprep.subr.bf16.mxu0 %v1642
        %2235 = vmatpush2.bf16.msra.mxu0 %v1641
        %2236 = vmatprep.subr.bf16.mxu0 %v1638
        %2237 = vmatpush2.bf16.msra.mxu0 %v1637
        %2238 = vmatprep.subr.bf16.mxu0 %v1634
        %2239 = vmatpush2.bf16.msra.mxu0 %v1633
        %2240 = vmatprep.subr.bf16.mxu0 %v1630
        %2241 = vmatpush2.bf16.msra.mxu0 %v1629
        %2242 = vmatprep.subr.bf16.mxu0 %v1626
        %2243 = vmatpush2.bf16.msra.mxu0 %v1625
        %2244 = vmatprep.mubr.bf16.mxu0 %v622
        %2245 = vmatmul.mubr.bf16.gmra.mxu0 %v621
        %v2246 = vpop.f32.mrf.mxu0
        %v2247 = vadd.f32 %v2204, %v2246
        %v2248 = vpop.f32.mrf.mxu0
        %v2249 = vadd.f32 %v2206, %v2248
        %v2250 = vpop.f32.mrf.mxu0
        %v2251 = vadd.f32 %v2208, %v2250
        %v2252 = vpop.f32.mrf.mxu0
        %v2253 = vadd.f32 %v2210, %v2252
        %2254 = vdwg.mxu0
        %v2255 = vadd.f32 %v319, %v2075
        %v2256 = vadd.f32 %v320, %v2077
        %v2257 = vadd.f32 %v321, %v2247
        %v2258 = vadd.f32 %v322, %v2249
        %v2259 = vadd.f32 %v323, %v2079
        %v2260 = vadd.f32 %v324, %v2081
        %v2261 = vadd.f32 %v325, %v2251
        %v2262 = vadd.f32 %v326, %v2253
        %2263 = vst [vmem:[%s277] sm:$0xff] %v2255
        %2264 = vst [vmem:[%s277 + $0x8] sm:$0xff] %v2256
        %2265 = vst [vmem:[%s277 + $0x10] sm:$0xff] %v2257
        %2266 = vst [vmem:[%s277 + $0x18] sm:$0xff] %v2258
        %2267 = vst [vmem:[%s277 + $0x20] sm:$0xff] %v2259
        %2268 = vst [vmem:[%s277 + $0x28] sm:$0xff] %v2260
        %2269 = vst [vmem:[%s277 + $0x30] sm:$0xff] %v2261
        %2270 = vst [vmem:[%s277 + $0x38] sm:$0xff] %v2262
        %s2271 = sand.u32 %s132, 1
        %s2272 = scalar_lea.sflag [#allocation4], %s2271
        %s2273 = sand.u32 %s132, 1
        %s2274 = smul.addr %s2273, 64
        %s2275 = scalar_lea.vmem [#allocation8], %s2274
        // Predicated region
        $region49: #{tpu_custom_call.1} parent=31 // pred_check
          %p2276 = pneg %p142
        $region50: #{tpu_custom_call.1} parent=31 // pred_check_branch
          %2278 = sbr.rel (%p2276) target = $region52
        $region51: #{tpu_custom_call.1} parent=31 // pred_region
          %s2279 = smul.u32 2, %s26
          %s2280 = smul.u32 4, %s27
          %s2282 = ssub.s32 1024, 1024
          %2283 = vsyncadd %s2272, %s2282
          %s2284 = smul.addr %s2279, 8
          %s2285 = sadd.s32 %s2280, %s2284
          %s2286 = smul.addr %s2285, 128
          %s2287 = scalar_lea.hbm %s3, %s2286
          %s2288 = sshll.u32 %s2275, 4
          %s2289 = int_to_ptr.vmem [resolvable:$true] %s2288
          %2294 = dma.vmem_to_hbm [thread:$0]  %s2289, 1024, %s2287, %s2272, 512, 1024, 32
        $region52: #{tpu_custom_call.1} parent=31 // pred_fallthru
          _
      $region32: #{tpu_custom_call.1} parent=5 // pred_fallthru
        _
      %p2295 = scmp.le.s32.totalorder 2, %s16
      // Predicated region
      $region53: #{tpu_custom_call.1} parent=5 // pred_check
        %p2296 = pneg %p2295
      $region54: #{tpu_custom_call.1} parent=5 // pred_check_branch
        %2298 = sbr.rel (%p2296) target = $region56
      $region55: #{tpu_custom_call.1} parent=5 // pred_region
        %s2299 = ssub.s32 %s16, 2
        // Predicated region
        $region57: #{tpu_custom_call.1} parent=55 // pred_check
          %p2300 = pneg %p148
        $region58: #{tpu_custom_call.1} parent=55 // pred_check_branch
          %2302 = sbr.rel (%p2300) target = $region60
        $region59: #{tpu_custom_call.1} parent=55 // pred_region
          %s2303 = sand.u32 %s133, 1
          %s2304 = scalar_lea.sflag [#allocation4], %s2303
          %s2305 = sand.u32 %s133, 1
          %s2306 = smul.addr %s2305, 64
          %s2307 = scalar_lea.vmem [#allocation8], %s2306
          %2308 = dma.done %s2304, 1024
        $region60: #{tpu_custom_call.1} parent=55 // pred_fallthru
          _
      $region56: #{tpu_custom_call.1} parent=5 // pred_fallthru
        _
    $region6: #{tpu_custom_call.1} parent=1 // loop_footer
      %s20 = sadd.s32 1, %s16
    $region7: #{tpu_custom_call.1} parent=1 // loop_footer_branch
      %15 = sbr.rel target = $region3
    $region8: #{tpu_custom_call.1} parent=1 // loop_exit
      _
    %2309 = vsyncpa [#allocation3], 1
    %s2310 = scalar_lea.sflag [#allocation3], 1
    %2311 = vsyncpa %s2310, 1
    %2312 = vsyncpa [#allocation6], 1
    %s2313 = scalar_lea.sflag [#allocation6], 1
    %2314 = vsyncpa %s2313, 1
    %2315 = vsyncpa [#allocation4], 1
    %s2316 = scalar_lea.sflag [#allocation4], 1
    %2317 = vsyncpa %s2316, 1

</llo_original>
